<compile_context>
chip_gen: v7x
topology: tpu7x:2x2x1
jax: 0.10.0
libtpu: 0.0.40
codegen_flags: <defaults>
</compile_context>

<pallas_src>
import functools

import jax
import jax.numpy as jnp
from jax.experimental import pallas as pl
from jax.experimental.pallas import tpu as pltpu


# ----------------------------------------------------------------------------- #
# Synthetic "ops" module (deterministic, self-consistent replacements)
# ----------------------------------------------------------------------------- #
def binned_rays(h_pano, w_pano, n_bins=361):
    """Ray-direction table: (n_bins, 3, h_pano, w_pano), one entry per integer degree."""
    degs = jnp.arange(n_bins, dtype=jnp.float32)
    az0 = 2.0 * jnp.pi * (jnp.arange(w_pano, dtype=jnp.float32) + 0.5) / w_pano - jnp.pi
    el0 = jnp.pi * (jnp.arange(h_pano, dtype=jnp.float32) + 0.5) / h_pano - jnp.pi / 2
    az = az0[None, None, :] + jnp.deg2rad(degs)[:, None, None]            # (A, 1, W)
    el = el0[None, :, None]                                               # (1, H, 1)
    x = jnp.cos(el) * jnp.cos(az)
    y = jnp.cos(el) * jnp.sin(az)
    z = jnp.broadcast_to(jnp.sin(el), x.shape)
    return jnp.stack([x, y, z], axis=1).astype(jnp.float32)               # (A, 3, H, W)


def grid_helper(bbox, near_locs, grid_size):
    """bbox: (4,)=[y0,x0,y1,x1]; near_locs: (N,2) -> D, theta each (grid_size**2, N)."""
    ys = jnp.linspace(bbox[0], bbox[2], grid_size)
    xs = jnp.linspace(bbox[1], bbox[3], grid_size)
    gy, gx = jnp.meshgrid(ys, xs, indexing="ij")
    pts = jnp.stack([gy.ravel(), gx.ravel()], axis=1)                     # (P, 2)
    dy = near_locs[None, :, 0] - pts[:, None, 0]                          # (P, N)
    dx = near_locs[None, :, 1] - pts[:, None, 1]
    d = jnp.sqrt(dy * dy + dx * dx)
    theta = jnp.mod(jnp.arctan2(dy, dx), 2.0 * jnp.pi)
    return d, theta


# ----------------------------------------------------------------------------- #
# Small helpers
# ----------------------------------------------------------------------------- #
def _round_up(x, m):
    return -(-x // m) * m


def _vmem_limit_bytes(frac=0.75, fallback=40 * 1024 * 1024):
    """Generation-aware VMEM cap (v7x has 64 MiB/TC vs 128 MiB on v5e/v6e)."""
    try:
        return int(frac * pltpu.get_tpu_info().vmem_capacity_bytes)
    except Exception:                                      # pragma: no cover
        return fallback


def _pick_block(total, candidates, fits):
    """Largest candidate dividing `total` whose VMEM footprint fits; `total` is a mult of 8."""
    for c in candidates:
        if c <= total and total % c == 0 and fits(c):
            return c
    return min(total, 8)


def _banded_conv_matrix(wk, H, W):
    """Dense matrix of a circular 5x5 conv.

    wk: (C, 5, 5) fused kernel.  Returns (C*H*W, H*W) with rows indexed (c, h_in, w_in) and
    columns (h_out, w_out), so logits = X(C*HW) @ Wmat implements the circular conv (the
    wrap is baked into the matrix -> no padded input is ever materialized)."""
    kk = jnp.arange(5)
    hin = (jnp.arange(H)[:, None] + kk[None, :] - 2) % H                    # (Ho, 5)
    win = (jnp.arange(W)[:, None] + kk[None, :] - 2) % W                    # (Wo, 5)
    oh_h = (hin[:, :, None] == jnp.arange(H)[None, None, :]).astype(jnp.float32)  # (Ho,5,Hi)
    oh_w = (win[:, :, None] == jnp.arange(W)[None, None, :]).astype(jnp.float32)  # (Wo,5,Wi)
    m = jnp.einsum("ckl,hki,wlj->cijhw", wk, oh_h, oh_w)                    # (C,Hi,Wi,Ho,Wo)
    return m.reshape(wk.shape[0] * H * W, H * W)


# ----------------------------------------------------------------------------- #
# Pallas kernel 1: fused GeoAttention circular conv + sigmoid, as one MXU matmul per block.
#   x_ref:     (1, 1, BP, Ko)   orientation channels, Ko = 3*H*W     (rows = grid points p)
#   wmat_ref:  (Ko, BHW)        banded circular-conv matrix column block
#   panoc_ref: (1, 1, 1, BHW)   pre-convolved panorama contribution for this neighbor n
#   const_ref: (1, 1, BP, 1)    per-(n, p) additive constant (distance/overhead/bias folded)
#   out_ref:   (1, 1, BP, BHW)  sigmoid attention weights (lane-dense, (M, HW) layout)
# ----------------------------------------------------------------------------- #
def _geo_conv_mxu_kernel(wmat_ref, panoc_ref, const_ref, x_ref, out_ref):
    logits = jnp.dot(x_ref[0, 0], wmat_ref[...], preferred_element_type=jnp.float32)
    logits = logits + panoc_ref[0, 0] + const_ref[0, 0]
    out_ref[0, 0] = jax.nn.sigmoid(logits)


def geo_attention_pallas(x_orient, wmat_o, pano_conv, const, compute_dtype=jnp.float32):
    """x_orient: (B, N, Pp, Ko); wmat_o: (Ko, HW); pano_conv: (B, N, HW); const: (B, N, Pp).
    Returns sigmoid attention weights (B, N, Pp, HW) in f32.

    compute_dtype=jnp.bfloat16 runs the matmul at full MXU rate on v6e/v7x (f32 accumulate)."""
    B, N, Pp, Ko = x_orient.shape
    HW = wmat_o.shape[1]
    limit = _vmem_limit_bytes()
    budget = min(limit // 2, 16 * 1024 * 1024)
    isz = jnp.dtype(compute_dtype).itemsize

    BHW = next((c for c in (1024, 512, 256, 128) if HW % c == 0), HW)       # lane block

    def fits(bp):
        return 2 * (bp * Ko * isz + Ko * BHW * isz + bp * BHW * 4) + 4 * BHW + 4 * bp <= budget

    BP = _pick_block(Pp, (512, 256, 128, 64, 32, 16, 8), fits)

    x = x_orient.astype(compute_dtype)
    wmat = wmat_o.astype(compute_dtype)
    panoc = pano_conv.reshape(B, N, 1, HW).astype(jnp.float32)
    const4 = const.reshape(B, N, Pp, 1).astype(jnp.float32)

    return pl.pallas_call(
        _geo_conv_mxu_kernel,
        out_shape=jax.ShapeDtypeStruct((B, N, Pp, HW), jnp.float32),
        grid=(B, N, Pp // BP, HW // BHW),
        in_specs=[
            pl.BlockSpec((Ko, BHW), lambda b, n, p, h: (0, h)),
            pl.BlockSpec((1, 1, 1, BHW), lambda b, n, p, h: (b, n, 0, h)),
            pl.BlockSpec((1, 1, BP, 1), lambda b, n, p, h: (b, n, p, 0)),
            pl.BlockSpec((1, 1, BP, Ko), lambda b, n, p, h: (b, n, p, 0)),
        ],
        out_specs=pl.BlockSpec((1, 1, BP, BHW), lambda b, n, p, h: (b, n, p, h)),
        compiler_params=pltpu.CompilerParams(
            dimension_semantics=("parallel", "parallel", "parallel", "parallel"),
            vmem_limit_bytes=limit),
    )(wmat, panoc, const4, x)


# ----------------------------------------------------------------------------- #
# Pallas kernel 2: aggregation as ONE deep batched matmul on the MXU.
#   grid_feats[b] = w_scaled[b] (P, K) @ feats[b] (K, Fpad),  K = N*H*W, bf16 in / f32 acc.
# ----------------------------------------------------------------------------- #
def _agg_kernel(w_ref, f_ref, o_ref, acc_ref):
    @pl.when(pl.program_id(2) == 0)
    def _():
        acc_ref[...] = jnp.zeros_like(acc_ref)

    acc_ref[...] += jnp.dot(w_ref[0], f_ref[0], preferred_element_type=jnp.float32)

    @pl.when(pl.program_id(2) == pl.num_programs(2) - 1)
    def _():
        o_ref[0] = acc_ref[...]


def aggregate_pallas(w_scaled, feats_r):
    """w_scaled: (B, Pp, K); feats_r: (B, K, Fp) with Fp a multiple of 128. Returns (B, Pp, Fp)."""
    B, Pp, K = w_scaled.shape
    Fp = feats_r.shape[2]
    limit = _vmem_limit_bytes()
    budget = min(limit // 2, 16 * 1024 * 1024)
    iw = jnp.dtype(w_scaled.dtype).itemsize
    ifd = jnp.dtype(feats_r.dtype).itemsize

    TK = next((t for t in (2048, 1024, 512, 256, 128) if K % t == 0), K)

    def fits(tp):
        return 2 * tp * TK * iw + 2 * TK * Fp * ifd + 3 * tp * Fp * 4 <= budget

    TP = _pick_block(Pp, (1024, 512, 256, 128, 64, 32, 16, 8), fits)

    return pl.pallas_call(
        _agg_kernel,
        out_shape=jax.ShapeDtypeStruct((B, Pp, Fp), jnp.float32),
        grid=(B, Pp // TP, K // TK),
        in_specs=[
            pl.BlockSpec((1, TP, TK), lambda b, i, k: (b, i, k)),
            pl.BlockSpec((1, TK, Fp), lambda b, i, k: (b, k, 0)),
        ],
        out_specs=pl.BlockSpec((1, TP, Fp), lambda b, i, k: (b, i, 0)),
        scratch_shapes=[pltpu.VMEM((TP, Fp), jnp.float32)],
        compiler_params=pltpu.CompilerParams(
            dimension_semantics=("parallel", "parallel", "arbitrary"),
            vmem_limit_bytes=limit),
    )(w_scaled, feats_r)


# ----------------------------------------------------------------------------- #
# Grid2d / GridV3 forward (Pallas fast path, batched; no per-batch python loop)
# ----------------------------------------------------------------------------- #
def grid2d_forward_pallas(bbox, near_locs, near_feats, overhead_feat, params, rays,
                          grid_size, conv_dtype=jnp.float32, agg_dtype=jnp.bfloat16):
    B, N, F_, H, W = near_feats.shape
    A = rays.shape[0]
    P = grid_size * grid_size
    HW = H * W
    gs = grid_size

    # --- host-side weight fusion: conv3 + conv5 + 1x1 finalconv -> single 5x5 ----------------
    # original input-channel order: [distance(1), orientation(3), panorama(2), overhead(2)]
    wf0 = params["wf"][0, 0, 0, 0]
    wf1 = params["wf"][0, 1, 0, 0]
    w3p = jnp.pad(params["w3"][0], ((0, 0), (1, 1), (1, 1)))               # (8,5,5)
    wfused = (wf0 * w3p + wf1 * params["w5"][0]).astype(jnp.float32)       # (8,5,5)
    bias_total = wf0 * params["b3"][0] + wf1 * params["b5"][0] + params["bf"][0]
    ksum = jnp.sum(wfused, axis=(1, 2))                                    # (8,)

    # banded circular-conv matrices (wrap baked in -> no jnp.pad(mode="wrap") copy)
    wmat_o = _banded_conv_matrix(wfused[1:4], H, W)                        # (3*HW, HW)
    wmat_p = _banded_conv_matrix(wfused[4:6], H, W)                        # (2*HW, HW)

    # --- geometry, batched --------------------------------------------------------------------
    D, theta = jax.vmap(lambda bb, nl: grid_helper(bb, nl, grid_size))(bbox, near_locs)  # (B,P,N)
    deg = jnp.clip(jnp.round(jnp.rad2deg(theta)).astype(jnp.int32), 0, A - 1)            # (B,P,N)

    # panorama channels depend only on n: convolve them ONCE per (b, n), never tile over P
    pano_ch = jnp.stack([jnp.max(near_feats, axis=2), jnp.mean(near_feats, axis=2)],
                        axis=2)                                            # (B,N,2,H,W)
    pano_conv = jnp.einsum("bnk,kq->bnq", pano_ch.reshape(B, N, 2 * HW), wmat_p)  # (B,N,HW)

    # spatially-constant channels fold into one additive per-(n, p) constant
    ov = overhead_feat.reshape(B, overhead_feat.shape[1], -1)              # (B, C_over, P)
    ov_max = jnp.max(ov, axis=1)                                           # (B, P)
    ov_mean = jnp.mean(ov, axis=1)                                         # (B, P)
    const = (jnp.transpose(D, (0, 2, 1)) * ksum[0]
             + (ov_max * ksum[6] + ov_mean * ksum[7] + bias_total)[:, None, :])  # (B,N,P)

    # orientation channels: gather the ray table directly into (B, N, P, 3*HW) (no transposes)
    rays_k = rays.reshape(A, 3 * HW)
    deg_np = jnp.transpose(deg, (0, 2, 1)).reshape(-1)                     # (B*N*P,)
    x_orient = jnp.take(rays_k, deg_np, axis=0).reshape(B, N, P, 3 * HW)

    # pad P for sublane alignment (padded rows produce finite garbage, sliced off at the end)
    Pp = _round_up(P, 8)
    if Pp != P:
        x_orient = jnp.pad(x_orient, ((0, 0), (0, 0), (0, Pp - P), (0, 0)))
        const = jnp.pad(const, ((0, 0), (0, 0), (0, Pp - P)))

    # --- kernel 1: fused circular conv + sigmoid ----------------------------------------------
    wout = geo_attention_pallas(x_orient, wmat_o, pano_conv, const, conv_dtype)  # (B,N,Pp,HW)

    # spatial sums are a cheap lane reduction; neighbor softmax
    sums = jnp.sum(wout, axis=-1)                                          # (B,N,Pp)
    total_weight = jax.nn.softmax(sums, axis=1)                            # (B,N,Pp)

    # the ONE big relayout (needed anyway for the returned attention maps)
    weight_pn = jnp.transpose(wout, (0, 2, 1, 3))                          # (B,Pp,N,HW)
    attention = weight_pn[:, :P].reshape(B, gs, gs, N, H, W)

    # --- kernel 2: aggregation (one deep MXU matmul, bf16 in / f32 accumulate) ----------------
    tw_pn = jnp.transpose(total_weight, (0, 2, 1))                         # (B,Pp,N)
    w_scaled = (weight_pn * tw_pn[..., None]).reshape(B, Pp, N * HW).astype(agg_dtype)

    Fp = _round_up(F_, 128)                                                # lane-dense stores
    feats_r = jnp.transpose(near_feats.reshape(B, N, F_, HW), (0, 1, 3, 2)).reshape(B, N * HW, F_)
    if Fp != F_:
        feats_r = jnp.pad(feats_r, ((0, 0), (0, 0), (0, Fp - F_)))
    feats_r = feats_r.astype(agg_dtype)

    grid_feats = aggregate_pallas(w_scaled, feats_r)[:, :P, :F_]           # (B,P,F)
    return grid_feats.reshape(B, gs, gs, F_), attention


# ----------------------------------------------------------------------------- #
# Pure-JAX reference (roll-based circular conv, un-fused) for verification
# ----------------------------------------------------------------------------- #
def _conv_circ_ref(x, w, b, k):
    pad = (k - 1) // 2
    out = jnp.zeros(x.shape[:1] + x.shape[2:], jnp.float32)
    for c in range(x.shape[1]):
        for kh in range(k):
            for kw in range(k):
                out = out + w[0, c, kh, kw] * jnp.roll(x[:, c], (pad - kh, pad - kw),
                                                       axis=(-2, -1))
    return out + b[0]


def grid2d_forward_ref(bbox, near_locs, near_feats, overhead_feat, params, rays, grid_size):
    B, N, F_, H, W = near_feats.shape
    P = grid_size * grid_size
    HW = H * W
    wf0 = params["wf"][0, 0, 0, 0]
    wf1 = params["wf"][0, 1, 0, 0]
    grids, attns = [], []
    for b in range(B):
        D, theta = grid_helper(bbox[b], near_locs[b], grid_size)
        deg = jnp.clip(jnp.round(jnp.rad2deg(theta)).astype(jnp.int32), 0, rays.shape[0] - 1)
        pano = near_feats[b]
        pano_ch = jnp.stack([jnp.max(pano, axis=1), jnp.mean(pano, axis=1)], axis=1)
        ov = overhead_feat[b].reshape(overhead_feat.shape[1], -1).T
        ov_ch = jnp.stack([jnp.max(ov, axis=1), jnp.mean(ov, axis=1)], axis=1)
        dist_map = jnp.broadcast_to(D[:, :, None, None, None], (P, N, 1, H, W))
        orient_map = rays[deg]
        x_pano = jnp.broadcast_to(pano_ch[None], (P, N, 2, H, W))
        x_ov = jnp.broadcast_to(ov_ch[:, None, :, None, None], (P, N, 2, H, W))
        inp8 = jnp.concatenate([dist_map, orient_map, x_pano, x_ov], axis=2)
        inp8 = inp8.reshape(P * N, 8, H, W).astype(jnp.float32)
        c1 = _conv_circ_ref(inp8, params["w3"], params["b3"], 3)
        c2 = _conv_circ_ref(inp8, params["w5"], params["b5"], 5)
        fused = wf0 * c1 + wf1 * c2 + params["bf"][0]
        weight = jax.nn.sigmoid(fused).reshape(P, N, H, W)
        sums = weight.reshape(P, N, -1).sum(-1)
        total_weight = jax.nn.softmax(sums, axis=1)
        feats3 = pano.reshape(N, F_, HW).transpose(0, 2, 1)
        grid_feats = jnp.einsum("pni,nif,pn->pf", weight.reshape(P, N, HW), feats3, total_weight)
        grids.append(grid_feats.reshape(grid_size, grid_size, F_))
        attns.append(weight.reshape(grid_size, grid_size, N, H, W))
    return jnp.stack(grids, 0), jnp.stack(attns, 0)


def init_params(key, c_in=8):
    k = jax.random.split(key, 6)
    s = 0.1
    return dict(
        w3=s * jax.random.normal(k[0], (1, c_in, 3, 3), jnp.float32),
        b3=s * jax.random.normal(k[1], (1,), jnp.float32),
        w5=s * jax.random.normal(k[2], (1, c_in, 5, 5), jnp.float32),
        b5=s * jax.random.normal(k[3], (1,), jnp.float32),
        wf=s * jax.random.normal(k[4], (1, 2, 1, 1), jnp.float32),
        bf=s * jax.random.normal(k[5], (1,), jnp.float32),
    )


if __name__ == "__main__":
    key = jax.random.PRNGKey(0)
    ks = jax.random.split(key, 8)

    grid_size = 8                       # small test size (module default is 32)
    B, N, F_, H, W = 2, 4, 16, 8, 32    # batch, neighbors, feat-channels, pano H, pano W
    C_over, Ho, Wo = 16, grid_size, grid_size   # overhead feature map (Ho*Wo == grid_size**2)

    bbox = jnp.array([[0.0, 0.0, 1.0, 1.0],
                      [-1.0, -1.0, 1.0, 1.0]], jnp.float32)                # (B,4)
    near_locs = jax.random.uniform(ks[0], (B, N, 2), jnp.float32, -0.5, 1.5)
    near_feats = jax.random.normal(ks[1], (B, N, F_, H, W), jnp.float32)
    overhead_feat = jax.random.normal(ks[2], (B, C_over, Ho, Wo), jnp.float32)

    params = init_params(ks[3], c_in=8)          # 1 + 3 + 2 + 2 input channels
    rays = binned_rays(H, W)                     # (361, 3, H, W)

    fwd = jax.jit(functools.partial(grid2d_forward_pallas, grid_size=grid_size))
    grid_p, attn_p = fwd(bbox, near_locs, near_feats, overhead_feat, params, rays)
    jax.block_until_ready((grid_p, attn_p))

    grid_r, attn_r = grid2d_forward_ref(bbox, near_locs, near_feats, overhead_feat,
                                        params, rays, grid_size)
    jax.block_until_ready((grid_r, attn_r))

    assert grid_p.shape == (B, grid_size, grid_size, F_)
    assert attn_p.shape == (B, grid_size, grid_size, N, H, W)

    # conv runs in f32 on the MXU; tolerance covers MXU-pass vs roll-conv summation order
    assert jnp.allclose(attn_p, attn_r, atol=2e-3, rtol=2e-3), "attention mismatch"
    # aggregation runs bf16 on the MXU (f32 accumulation) -> relaxed, scale-relative tolerance
    err = float(jnp.max(jnp.abs(grid_p - grid_r)))
    scale = float(jnp.max(jnp.abs(grid_r)))
    assert err <= 0.02 * scale + 1e-3, f"grid features mismatch: err={err}, scale={scale}"

    print("KERNEL_OK")
</pallas_src>

<mosaic_0001>
module attributes {stable_mosaic.version = 11 : i64} {
  func.func @_geo_conv_mxu_kernel(%arg0: i32, %arg1: i32, %arg2: i32, %arg3: i32, %arg4: memref<768x256xf32, #tpu.memory_space<vmem>>, %arg5: memref<1x1x1x256xf32, #tpu.memory_space<vmem>>, %arg6: memref<1x1x64x1xf32, #tpu.memory_space<vmem>>, %arg7: memref<1x1x64x768xf32, #tpu.memory_space<vmem>>, %arg8: memref<1x1x64x256xf32, #tpu.memory_space<vmem>>) attributes {dimension_semantics = [#tpu.dimension_semantics<parallel>, #tpu.dimension_semantics<parallel>, #tpu.dimension_semantics<parallel>, #tpu.dimension_semantics<parallel>], iteration_bounds = array<i64: 2, 4, 1, 1>, scalar_prefetch = 0 : i64, scratch_operands = 0 : i64, tpu.core_type = #tpu.core_type<tc>, window_params = [{transform_indices = @transform_0, window_bounds = array<i64: 768, 256>}, {transform_indices = @transform_1, window_bounds = array<i64: 1, 1, 1, 256>}, {transform_indices = @transform_2, window_bounds = array<i64: 1, 1, 64, 1>}, {transform_indices = @transform_3, window_bounds = array<i64: 1, 1, 64, 768>}, {transform_indices = @transform_4, window_bounds = array<i64: 1, 1, 64, 256>}]} {
    %c0 = arith.constant 0 : index
    %c0_0 = arith.constant 0 : index
    %c0_1 = arith.constant 0 : index
    %c0_2 = arith.constant 0 : index
    %0 = vector.load %arg7[%c0, %c0_0, %c0_1, %c0_2] : memref<1x1x64x768xf32, #tpu.memory_space<vmem>>, vector<1x1x64x768xf32>
    %1 = vector.shape_cast %0 : vector<1x1x64x768xf32> to vector<64x768xf32>
    %c0_3 = arith.constant 0 : index
    %c0_4 = arith.constant 0 : index
    %2 = vector.load %arg4[%c0_3, %c0_4] : memref<768x256xf32, #tpu.memory_space<vmem>>, vector<768x256xf32>
    %cst = arith.constant dense<0.000000e+00> : vector<64x256xf32>
    %3 = tpu.matmul %1, %2, %cst {dimension_numbers = #tpu.dot_dimension_numbers<[1], [0], [0], [1], [0, 0, 1, 1], [], []>} : vector<64x768xf32>, vector<768x256xf32>, vector<64x256xf32> -> vector<64x256xf32>
    %c0_5 = arith.constant 0 : index
    %c0_6 = arith.constant 0 : index
    %c0_7 = arith.constant 0 : index
    %c0_8 = arith.constant 0 : index
    %4 = vector.load %arg5[%c0_5, %c0_6, %c0_7, %c0_8] : memref<1x1x1x256xf32, #tpu.memory_space<vmem>>, vector<1x1x1x256xf32>
    %5 = vector.shape_cast %4 : vector<1x1x1x256xf32> to vector<1x256xf32>
    %6 = vector.broadcast %5 : vector<1x256xf32> to vector<64x256xf32>
    %7 = arith.addf %3, %6 : vector<64x256xf32>
    %c0_9 = arith.constant 0 : index
    %c0_10 = arith.constant 0 : index
    %c0_11 = arith.constant 0 : index
    %c0_12 = arith.constant 0 : index
    %8 = vector.load %arg6[%c0_9, %c0_10, %c0_11, %c0_12] : memref<1x1x64x1xf32, #tpu.memory_space<vmem>>, vector<1x1x64x1xf32>
    %9 = vector.shape_cast %8 : vector<1x1x64x1xf32> to vector<64x1xf32>
    %10 = vector.broadcast %9 : vector<64x1xf32> to vector<64x256xf32>
    %11 = arith.addf %7, %10 : vector<64x256xf32>
    %12 = arith.negf %11 : vector<64x256xf32>
    %13 = math.exp %12 : vector<64x256xf32>
    %cst_13 = arith.constant 1.000000e+00 : f32
    %14 = vector.broadcast %cst_13 : f32 to vector<64x256xf32>
    %15 = arith.addf %14, %13 : vector<64x256xf32>
    %16 = arith.divf %14, %15 : vector<64x256xf32>
    %c0_14 = arith.constant 0 : index
    %c0_15 = arith.constant 0 : index
    %c0_16 = arith.constant 0 : index
    %c0_17 = arith.constant 0 : index
    %17 = vector.load %arg8[%c0_14, %c0_15, %c0_16, %c0_17] : memref<1x1x64x256xf32, #tpu.memory_space<vmem>>, vector<1x1x64x256xf32>
    %18 = vector.shape_cast %17 : vector<1x1x64x256xf32> to vector<64x256xf32>
    %19 = vector.shape_cast %16 : vector<64x256xf32> to vector<1x1x64x256xf32>
    tpu.vector_store %arg8[%c0_14, %c0_15, %c0_16, %c0_17], %19 {strides = array<i32>} : memref<1x1x64x256xf32, #tpu.memory_space<vmem>>, vector<1x1x64x256xf32>,
    return
  }
  func.func @transform_0(%arg0: i32, %arg1: i32, %arg2: i32, %arg3: i32) -> (i32, i32) {
    %c0_i32 = arith.constant 0 : i32
    %c0_i32_0 = arith.constant 0 : i32
    return %c0_i32, %arg3 : i32, i32
  }
  func.func @transform_1(%arg0: i32, %arg1: i32, %arg2: i32, %arg3: i32) -> (i32, i32, i32, i32) {
    %c0_i32 = arith.constant 0 : i32
    %c0_i32_0 = arith.constant 0 : i32
    return %arg0, %arg1, %c0_i32, %arg3 : i32, i32, i32, i32
  }
  func.func @transform_2(%arg0: i32, %arg1: i32, %arg2: i32, %arg3: i32) -> (i32, i32, i32, i32) {
    %c0_i32 = arith.constant 0 : i32
    %c0_i32_0 = arith.constant 0 : i32
    return %arg0, %arg1, %arg2, %c0_i32 : i32, i32, i32, i32
  }
  func.func @transform_3(%arg0: i32, %arg1: i32, %arg2: i32, %arg3: i32) -> (i32, i32, i32, i32) {
    %c0_i32 = arith.constant 0 : i32
    %c0_i32_0 = arith.constant 0 : i32
    return %arg0, %arg1, %arg2, %c0_i32 : i32, i32, i32, i32
  }
  func.func @transform_4(%arg0: i32, %arg1: i32, %arg2: i32, %arg3: i32) -> (i32, i32, i32, i32) {
    %c0_i32 = arith.constant 0 : i32
    return %arg0, %arg1, %arg2, %arg3 : i32, i32, i32, i32
  }
}

module attributes {stable_mosaic.version = 11 : i64} {
  func.func @_agg_kernel(%arg0: i32, %arg1: i32, %arg2: i32, %arg3: memref<1x64x1024xbf16, #tpu.memory_space<vmem>>, %arg4: memref<1x1024x128xbf16, #tpu.memory_space<vmem>>, %arg5: memref<1x64x128xf32, #tpu.memory_space<vmem>>, %arg6: memref<64x128xf32, #tpu.memory_space<vmem>>) attributes {dimension_semantics = [#tpu.dimension_semantics<parallel>, #tpu.dimension_semantics<parallel>, #tpu.dimension_semantics<arbitrary>], iteration_bounds = array<i64: 2, 1, 1>, scalar_prefetch = 0 : i64, scratch_operands = 1 : i64, tpu.core_type = #tpu.core_type<tc>, window_params = [{transform_indices = @transform_0, window_bounds = array<i64: 1, 64, 1024>}, {transform_indices = @transform_1, window_bounds = array<i64: 1, 1024, 128>}, {transform_indices = @transform_2, window_bounds = array<i64: 1, 64, 128>}]} {
    %c0_i32 = arith.constant 0 : i32
    %0 = arith.cmpi eq, %arg2, %c0_i32 : i32
    %1 = arith.extui %0 : i1 to i32
    %c0_i32_0 = arith.constant 0 : i32
    %2 = arith.cmpi ne, %1, %c0_i32_0 : i32
    scf.if %2 {
      %cst_12 = arith.constant 0.000000e+00 : f32
      %14 = vector.broadcast %cst_12 : f32 to vector<64x128xf32>
      %c0_13 = arith.constant 0 : index
      %c0_14 = arith.constant 0 : index
      %15 = vector.load %arg6[%c0_13, %c0_14] : memref<64x128xf32, #tpu.memory_space<vmem>>, vector<64x128xf32>
      tpu.vector_store %arg6[%c0_13, %c0_14], %14 {strides = array<i32>} : memref<64x128xf32, #tpu.memory_space<vmem>>, vector<64x128xf32>,
    } else {
    }
    %c0 = arith.constant 0 : index
    %c0_1 = arith.constant 0 : index
    %3 = vector.load %arg6[%c0, %c0_1] : memref<64x128xf32, #tpu.memory_space<vmem>>, vector<64x128xf32>
    %c0_2 = arith.constant 0 : index
    %c0_3 = arith.constant 0 : index
    %c0_4 = arith.constant 0 : index
    %4 = vector.load %arg3[%c0_2, %c0_3, %c0_4] : memref<1x64x1024xbf16, #tpu.memory_space<vmem>>, vector<1x64x1024xbf16>
    %5 = vector.shape_cast %4 : vector<1x64x1024xbf16> to vector<64x1024xbf16>
    %c0_5 = arith.constant 0 : index
    %c0_6 = arith.constant 0 : index
    %c0_7 = arith.constant 0 : index
    %6 = vector.load %arg4[%c0_5, %c0_6, %c0_7] : memref<1x1024x128xbf16, #tpu.memory_space<vmem>>, vector<1x1024x128xbf16>
    %7 = vector.shape_cast %6 : vector<1x1024x128xbf16> to vector<1024x128xbf16>
    %cst = arith.constant dense<0.000000e+00> : vector<64x128xf32>
    %8 = tpu.matmul %5, %7, %cst {dimension_numbers = #tpu.dot_dimension_numbers<[1], [0], [0], [1], [0, 0, 1, 1], [], []>} : vector<64x1024xbf16>, vector<1024x128xbf16>, vector<64x128xf32> -> vector<64x128xf32>
    %9 = arith.addf %3, %8 : vector<64x128xf32>
    %c0_8 = arith.constant 0 : index
    %c0_9 = arith.constant 0 : index
    %10 = vector.load %arg6[%c0_8, %c0_9] : memref<64x128xf32, #tpu.memory_space<vmem>>, vector<64x128xf32>
    tpu.vector_store %arg6[%c0_8, %c0_9], %9 {strides = array<i32>} : memref<64x128xf32, #tpu.memory_space<vmem>>, vector<64x128xf32>,
    %c0_i32_10 = arith.constant 0 : i32
    %11 = arith.cmpi eq, %arg2, %c0_i32_10 : i32
    %12 = arith.extui %11 : i1 to i32
    %c0_i32_11 = arith.constant 0 : i32
    %13 = arith.cmpi ne, %12, %c0_i32_11 : i32
    scf.if %13 {
      %c0_12 = arith.constant 0 : index
      %c0_13 = arith.constant 0 : index
      %14 = vector.load %arg6[%c0_12, %c0_13] : memref<64x128xf32, #tpu.memory_space<vmem>>, vector<64x128xf32>
      %c0_14 = arith.constant 0 : index
      %c0_15 = arith.constant 0 : index
      %c0_16 = arith.constant 0 : index
      %15 = vector.load %arg5[%c0_14, %c0_15, %c0_16] : memref<1x64x128xf32, #tpu.memory_space<vmem>>, vector<1x64x128xf32>
      %16 = vector.shape_cast %15 : vector<1x64x128xf32> to vector<64x128xf32>
      %17 = vector.shape_cast %14 : vector<64x128xf32> to vector<1x64x128xf32>
      tpu.vector_store %arg5[%c0_14, %c0_15, %c0_16], %17 {strides = array<i32>} : memref<1x64x128xf32, #tpu.memory_space<vmem>>, vector<1x64x128xf32>,
    } else {
    }
    return
  }
  func.func @transform_0(%arg0: i32, %arg1: i32, %arg2: i32) -> (i32, i32, i32) {
    %c0_i32 = arith.constant 0 : i32
    return %arg0, %arg1, %arg2 : i32, i32, i32
  }
  func.func @transform_1(%arg0: i32, %arg1: i32, %arg2: i32) -> (i32, i32, i32) {
    %c0_i32 = arith.constant 0 : i32
    %c0_i32_0 = arith.constant 0 : i32
    return %arg0, %arg2, %c0_i32 : i32, i32, i32
  }
  func.func @transform_2(%arg0: i32, %arg1: i32, %arg2: i32) -> (i32, i32, i32) {
    %c0_i32 = arith.constant 0 : i32
    %c0_i32_0 = arith.constant 0 : i32
    return %arg0, %arg1, %c0_i32 : i32, i32, i32
  }
}

</mosaic_0001>

<llo_original>
// kernel: sub.39
$region0: #{sub.39}
  %s0 = inlined_call_operand.vmem [shape: f32[2,8,8], index: 0, kind: input, shape index: {}]
  %s1 = inlined_call_operand.vmem [shape: f32[2,64], index: 1, kind: output, shape index: {}]
  $region1: #{sub.39} parent=0
    #allocation0 [shape = 'u8[4096]{0}', space=vmem, size = 0x1000, scoped, tag = 'scoped mem for output reshape']
    %s2 = smov 3
    %v3 = vld [vmem:[%s0] ss:$8 sm:%s2]
    %vm4 = vcmask 64512
    %5 = vst.msk [vmem:[#allocation0] sm:$0x3] %vm4, %v3
    %s6 = scalar_lea.vmem %s0, 7
    %s7 = smov 3
    %v8 = vld [vmem:[%s6] ss:$8 sm:%s7]
    %9 = vrot.lane.b32.xlu0 %v8, 56
    %v10 = vpop.permute.xlu0 %9
    %vm11 = vcmask 523712
    %12 = vst.msk [vmem:[#allocation0] sm:$0x3] %vm11, %v10
    %s13 = scalar_lea.vmem %s0, 6
    %s14 = smov 3
    %v15 = vld [vmem:[%s13] ss:$8 sm:%s14]
    %16 = vrot.lane.b32.xlu0 %v15, 48
    %v17 = vpop.permute.xlu0 %16
    %vm18 = vcmask 458112
    %19 = vst.msk [vmem:[#allocation0] sm:$0x3] %vm18, %v17
    %s20 = scalar_lea.vmem %s0, 5
    %s21 = smov 3
    %v22 = vld [vmem:[%s20] ss:$8 sm:%s21]
    %23 = vrot.lane.b32.xlu0 %v22, 40
    %v24 = vpop.permute.xlu0 %23
    %vm25 = vcmask 392512
    %26 = vst.msk [vmem:[#allocation0] sm:$0x3] %vm25, %v24
    %s27 = scalar_lea.vmem %s0, 4
    %s28 = smov 3
    %v29 = vld [vmem:[%s27] ss:$8 sm:%s28]
    %30 = vrot.lane.b32.xlu0 %v29, 32
    %v31 = vpop.permute.xlu0 %30
    %vm32 = vcmask 326912
    %33 = vst.msk [vmem:[#allocation0] sm:$0x3] %vm32, %v31
    %s34 = scalar_lea.vmem %s0, 3
    %s35 = smov 3
    %v36 = vld [vmem:[%s34] ss:$8 sm:%s35]
    %37 = vrot.lane.b32.xlu0 %v36, 24
    %v38 = vpop.permute.xlu0 %37
    %vm39 = vcmask 261312
    %40 = vst.msk [vmem:[#allocation0] sm:$0x3] %vm39, %v38
    %s41 = scalar_lea.vmem %s0, 2
    %s42 = smov 3
    %v43 = vld [vmem:[%s41] ss:$8 sm:%s42]
    %44 = vrot.lane.b32.xlu0 %v43, 16
    %v45 = vpop.permute.xlu0 %44
    %vm46 = vcmask 195712
    %47 = vst.msk [vmem:[#allocation0] sm:$0x3] %vm46, %v45
    %s48 = scalar_lea.vmem %s0, 1
    %s49 = smov 3
    %v50 = vld [vmem:[%s48] ss:$8 sm:%s49]
    %51 = vrot.lane.b32.xlu0 %v50, 8
    %v52 = vpop.permute.xlu0 %51
    %vm53 = vcmask 130112
    %54 = vst.msk [vmem:[#allocation0] sm:$0x3] %vm53, %v52
    %s56 = sshllo.u32 0, 2
    %v58 = vld [vmem:[#allocation0] sm:%s56]
    %s59 = sshllo.u32 0, 2
    %60 = vst [vmem:[%s1] sm:%s59] %v58

// kernel: grid2d_forward_pallas.2
$region0: #{grid2d_forward_pallas.2}
  #allocation0 [shape = 'u32[]', space=smem, size = 0x4, offset = 0x4, fixed_abs, tag = 'smem constant byte address 0x4 - core index']
  #allocation1 [shape = 'u32[144,128]{1,0:T(1,128)}', space=vmem, size = 0x12000, scoped, tag = 'internal scratch']
  %s0 = inlined_call_operand.vmem [shape: f32[768,256], index: 0, kind: input, shape index: {}]
  %s1 = inlined_call_operand.vmem [shape: f32[2,4,1,256], index: 1, kind: input, shape index: {}]
  %s2 = inlined_call_operand.vmem [shape: f32[2,4,64,1], index: 2, kind: input, shape index: {}]
  %s3 = inlined_call_operand.vmem [shape: f32[2,4,64,768], index: 3, kind: input, shape index: {}]
  %s4 = inlined_call_operand.vmem [shape: f32[2,4,64,256], index: 4, kind: output, shape index: {}]
  %s5 = sld [smem:[#allocation0]]
  $region49: #{grid2d_forward_pallas.2} parent=0
    _
  %s7 = ssub.s32 1, %s5
  %s8 = scalar_select 0, %s7, %s5
  loop: start=0, step=1, limit=10
  $region2: #{grid2d_forward_pallas.2} parent=0 // loop_pre_header
    _
  $region3: #{grid2d_forward_pallas.2} parent=0 // loop_header
    %s10 = sphi 0, %s14
    %p11 = scmp.ge.s32.totalorder %s10, 10
    %s17 = sphi 0, %s43
    %s18 = sphi 0, %s39
    %s19 = sphi 0, %s35
    %s20 = sphi 0, %s31
    %s21 = sphi 0, %s17
    %s22 = sphi 0, %s18
    %s23 = sphi 0, %s19
    %s24 = sphi 0, %s20
    %s25 = sphi 0, %s21
    %s26 = sphi 0, %s22
    %s27 = sphi 0, %s23
    %s28 = sphi 0, %s24
    %s46 = sphi 0, %s48
    %s49 = sphi 0, %s46
    %s50 = sphi 0, %s49
    %s66 = sphi 0, %s50
    %s76 = sphi 0, %s78
    %s79 = sphi 0, %s76
    %s80 = sphi 0, %s79
    %s96 = sphi 0, %s80
    %s106 = sphi 0, %s108
    %s109 = sphi 0, %s106
    %s110 = sphi 0, %s109
    %s126 = sphi 0, %s110
    %s136 = sphi 0, %s138
    %s139 = sphi 0, %s136
    %s140 = sphi 0, %s139
    %s156 = sphi 0, %s140
    %s168 = sphi 0, %s170
    %s171 = sphi 0, %s168
    %s172 = sphi 0, %s171
    %s188 = sphi 0, %s172
  $region4: #{grid2d_forward_pallas.2} parent=0 // loop_header_branch
    %13 = sbr.rel (%p11) target = $region8
  $region5: #{grid2d_forward_pallas.2} parent=0 // loop_body
    %s15 = ssub.s32 %s10, 1
    %s16 = ssub.s32 %s10, 2
    %s29 = sadd.s32 1, %s20
    %p30 = scmp.ge.s32.totalorder %s29, 1
    %s31 = scalar_select %p30, 0, %s29
    %s32 = sadd.s32 1, %s19
    %s33 = scalar_select %p30, %s32, %s19
    %p34 = scmp.ge.s32.totalorder %s33, 1
    %s35 = scalar_select %p34, 0, %s33
    %s36 = sadd.s32 1, %s18
    %s37 = scalar_select %p34, %s36, %s18
    %p38 = scmp.ge.s32.totalorder %s37, 4
    %s39 = scalar_select %p38, 0, %s37
    %s40 = sadd.s32 1, %s17
    %s41 = scalar_select %p38, %s40, %s17
    %p42 = scmp.ge.s32.totalorder %s41, 2
    %s43 = scalar_select %p42, 0, %s41
    %s44 = ssub.s32 %s20, %s31
    %p45 = scmp.eq.s32.totalorder %s44, 0
    %s47 = sadd.s32 %s46, 1
    %s48 = scalar_select %p45, %s46, %s47
    %p51 = pneg %p45
    %p52 = scmp.eq.s32.totalorder %s10, 7
    %p53 = por %p51, %p52
    %p54 = scmp.ne.s32.totalorder %s46, %s49
    %p55 = scmp.eq.s32.totalorder %s10, 0
    %p56 = por %p54, %p55
    %p57 = scmp.ne.s32.totalorder %s46, %s49
    %p58 = scmp.eq.s32.totalorder %s15, 7
    %p59 = por %p57, %p58
    %p60 = scmp.ne.s32.totalorder %s49, %s50
    %p61 = scmp.eq.s32.totalorder %s15, 0
    %p62 = por %p60, %p61
    %p63 = scmp.ne.s32.totalorder %s49, %s50
    %p64 = scmp.eq.s32.totalorder %s16, 7
    %p65 = por %p63, %p64
    %p67 = scmp.ne.s32.totalorder %s50, %s66
    %p68 = scmp.eq.s32.totalorder %s16, 0
    %p69 = por %p67, %p68
    %s70 = ssub.s32 %s17, %s43
    %s71 = ssub.s32 %s18, %s39
    %s72 = sor.u32 %s70, %s71
    %s73 = ssub.s32 %s20, %s31
    %s74 = sor.u32 %s72, %s73
    %p75 = scmp.eq.s32.totalorder %s74, 0
    %s77 = sadd.s32 %s76, 1
    %s78 = scalar_select %p75, %s76, %s77
    %p81 = pneg %p75
    %p82 = scmp.eq.s32.totalorder %s10, 7
    %p83 = por %p81, %p82
    %p84 = scmp.ne.s32.totalorder %s76, %s79
    %p85 = scmp.eq.s32.totalorder %s10, 0
    %p86 = por %p84, %p85
    %p87 = scmp.ne.s32.totalorder %s76, %s79
    %p88 = scmp.eq.s32.totalorder %s15, 7
    %p89 = por %p87, %p88
    %p90 = scmp.ne.s32.totalorder %s79, %s80
    %p91 = scmp.eq.s32.totalorder %s15, 0
    %p92 = por %p90, %p91
    %p93 = scmp.ne.s32.totalorder %s79, %s80
    %p94 = scmp.eq.s32.totalorder %s16, 7
    %p95 = por %p93, %p94
    %p97 = scmp.ne.s32.totalorder %s80, %s96
    %p98 = scmp.eq.s32.totalorder %s16, 0
    %p99 = por %p97, %p98
    %s100 = ssub.s32 %s17, %s43
    %s101 = ssub.s32 %s18, %s39
    %s102 = sor.u32 %s100, %s101
    %s103 = ssub.s32 %s19, %s35
    %s104 = sor.u32 %s102, %s103
    %p105 = scmp.eq.s32.totalorder %s104, 0
    %s107 = sadd.s32 %s106, 1
    %s108 = scalar_select %p105, %s106, %s107
    %p111 = pneg %p105
    %p112 = scmp.eq.s32.totalorder %s10, 7
    %p113 = por %p111, %p112
    %p114 = scmp.ne.s32.totalorder %s106, %s109
    %p115 = scmp.eq.s32.totalorder %s10, 0
    %p116 = por %p114, %p115
    %p117 = scmp.ne.s32.totalorder %s106, %s109
    %p118 = scmp.eq.s32.totalorder %s15, 7
    %p119 = por %p117, %p118
    %p120 = scmp.ne.s32.totalorder %s109, %s110
    %p121 = scmp.eq.s32.totalorder %s15, 0
    %p122 = por %p120, %p121
    %p123 = scmp.ne.s32.totalorder %s109, %s110
    %p124 = scmp.eq.s32.totalorder %s16, 7
    %p125 = por %p123, %p124
    %p127 = scmp.ne.s32.totalorder %s110, %s126
    %p128 = scmp.eq.s32.totalorder %s16, 0
    %p129 = por %p127, %p128
    %s130 = ssub.s32 %s17, %s43
    %s131 = ssub.s32 %s18, %s39
    %s132 = sor.u32 %s130, %s131
    %s133 = ssub.s32 %s19, %s35
    %s134 = sor.u32 %s132, %s133
    %p135 = scmp.eq.s32.totalorder %s134, 0
    %s137 = sadd.s32 %s136, 1
    %s138 = scalar_select %p135, %s136, %s137
    %p141 = pneg %p135
    %p142 = scmp.eq.s32.totalorder %s10, 7
    %p143 = por %p141, %p142
    %p144 = scmp.ne.s32.totalorder %s136, %s139
    %p145 = scmp.eq.s32.totalorder %s10, 0
    %p146 = por %p144, %p145
    %p147 = scmp.ne.s32.totalorder %s136, %s139
    %p148 = scmp.eq.s32.totalorder %s15, 7
    %p149 = por %p147, %p148
    %p150 = scmp.ne.s32.totalorder %s139, %s140
    %p151 = scmp.eq.s32.totalorder %s15, 0
    %p152 = por %p150, %p151
    %p153 = scmp.ne.s32.totalorder %s139, %s140
    %p154 = scmp.eq.s32.totalorder %s16, 7
    %p155 = por %p153, %p154
    %p157 = scmp.ne.s32.totalorder %s140, %s156
    %p158 = scmp.eq.s32.totalorder %s16, 0
    %p159 = por %p157, %p158
    %s160 = ssub.s32 %s17, %s43
    %s161 = ssub.s32 %s18, %s39
    %s162 = sor.u32 %s160, %s161
    %s163 = ssub.s32 %s19, %s35
    %s164 = sor.u32 %s162, %s163
    %s165 = ssub.s32 %s20, %s31
    %s166 = sor.u32 %s164, %s165
    %p167 = scmp.eq.s32.totalorder %s166, 0
    %s169 = sadd.s32 %s168, 1
    %s170 = scalar_select %p167, %s168, %s169
    %p173 = pneg %p167
    %p174 = scmp.eq.s32.totalorder %s10, 7
    %p175 = por %p173, %p174
    %p176 = scmp.ne.s32.totalorder %s168, %s171
    %p177 = scmp.eq.s32.totalorder %s10, 0
    %p178 = por %p176, %p177
    %p179 = scmp.ne.s32.totalorder %s168, %s171
    %p180 = scmp.eq.s32.totalorder %s15, 7
    %p181 = por %p179, %p180
    %p182 = scmp.ne.s32.totalorder %s171, %s172
    %p183 = scmp.eq.s32.totalorder %s15, 0
    %p184 = por %p182, %p183
    %p185 = scmp.ne.s32.totalorder %s171, %s172
    %p186 = scmp.eq.s32.totalorder %s16, 7
    %p187 = por %p185, %p186
    %p189 = scmp.ne.s32.totalorder %s172, %s188
    %p190 = scmp.eq.s32.totalorder %s16, 0
    %p191 = por %p189, %p190
    %p192 = scmp.le.s32.totalorder 1, %s10
    %p193 = scmp.lt.s32.totalorder %s10, 9
    %p194 = pnand %p192, %p193
    %p195 = pneg %p194
    // Predicated region
    $region9: #{grid2d_forward_pallas.2} parent=5 // pred_check
      _
    $region10: #{grid2d_forward_pallas.2} parent=5 // pred_check_branch
      %197 = sbr.rel (%p194) target = $region12
    $region11: #{grid2d_forward_pallas.2} parent=5 // pred_region
      %s198 = ssub.s32 %s10, 1
      // Predicated region
      $region13: #{grid2d_forward_pallas.2} parent=11 // pred_check
        %p199 = pneg %p62
      $region14: #{grid2d_forward_pallas.2} parent=11 // pred_check_branch
        %201 = sbr.rel (%p199) target = $region16
      $region15: #{grid2d_forward_pallas.2} parent=11 // pred_region
        %s202 = smul.u32 2, %s24
        %p203 = scmp.lt.s32.totalorder %s202, 1
        %s204 = scalar_select %p203, %s202, 1
        %s205 = smul.addr %s204, 8
        %s206 = scalar_lea.vmem %s0, %s205
        %s207 = smul.u32 2, %s24
      $region16: #{grid2d_forward_pallas.2} parent=11 // pred_fallthru
        _
    $region12: #{grid2d_forward_pallas.2} parent=5 // pred_fallthru
      _
    %p208 = scmp.lt.s32.totalorder %s10, 8
    // Predicated region
    $region17: #{grid2d_forward_pallas.2} parent=5 // pred_check
      %p209 = pneg %p208
    $region18: #{grid2d_forward_pallas.2} parent=5 // pred_check_branch
      %211 = sbr.rel (%p209) target = $region20
    $region19: #{grid2d_forward_pallas.2} parent=5 // pred_region
      // Predicated region
      $region21: #{grid2d_forward_pallas.2} parent=19 // pred_check
        %p212 = pneg %p86
      $region22: #{grid2d_forward_pallas.2} parent=19 // pred_check_branch
        %214 = sbr.rel (%p212) target = $region24
      $region23: #{grid2d_forward_pallas.2} parent=19 // pred_region
        %s215 = smul.u32 2, %s20
        %p216 = scmp.lt.s32.totalorder %s17, 1
        %s217 = scalar_select %p216, %s17, 1
        %p218 = scmp.lt.s32.totalorder %s18, 3
        %s219 = scalar_select %p218, %s18, 3
        %p220 = scmp.lt.s32.totalorder %s215, 1
        %s221 = scalar_select %p220, %s215, 1
        %s222 = smul.addr %s219, 2
        %s223 = sadd.s32 %s221, %s222
        %s224 = smul.addr %s217, 8
        %s225 = sadd.s32 %s223, %s224
        %s226 = scalar_lea.vmem %s1, %s225
        %s227 = smul.u32 2, %s20
      $region24: #{grid2d_forward_pallas.2} parent=19 // pred_fallthru
        _
      // Predicated region
      $region25: #{grid2d_forward_pallas.2} parent=19 // pred_check
        %p228 = pneg %p116
      $region26: #{grid2d_forward_pallas.2} parent=19 // pred_check_branch
        %230 = sbr.rel (%p228) target = $region28
      $region27: #{grid2d_forward_pallas.2} parent=19 // pred_region
        %s231 = smul.u32 8, %s19
        %p232 = scmp.lt.s32.totalorder %s17, 1
        %s233 = scalar_select %p232, %s17, 1
        %p234 = scmp.lt.s32.totalorder %s18, 3
        %s235 = scalar_select %p234, %s18, 3
        %p236 = scmp.lt.s32.totalorder %s231, 7
        %s237 = scalar_select %p236, %s231, 7
        %s238 = smul.addr %s235, 8
        %s239 = sadd.s32 %s237, %s238
        %s240 = smul.addr %s233, 32
        %s241 = sadd.s32 %s239, %s240
        %s242 = smul.addr %s241, 8
        %s243 = scalar_lea.vmem %s2, %s242
        %s244 = smul.u32 8, %s19
      $region28: #{grid2d_forward_pallas.2} parent=19 // pred_fallthru
        _
      // Predicated region
      $region29: #{grid2d_forward_pallas.2} parent=19 // pred_check
        %p245 = pneg %p146
      $region30: #{grid2d_forward_pallas.2} parent=19 // pred_check_branch
        %247 = sbr.rel (%p245) target = $region32
      $region31: #{grid2d_forward_pallas.2} parent=19 // pred_region
        %s248 = smul.u32 8, %s19
        %p249 = scmp.lt.s32.totalorder %s17, 1
        %s250 = scalar_select %p249, %s17, 1
        %p251 = scmp.lt.s32.totalorder %s18, 3
        %s252 = scalar_select %p251, %s18, 3
        %p253 = scmp.lt.s32.totalorder %s248, 7
        %s254 = scalar_select %p253, %s248, 7
        %s255 = smul.addr %s254, 6
        %s256 = smul.addr %s252, 48
        %s257 = sadd.s32 %s255, %s256
        %s258 = smul.addr %s250, 192
        %s259 = sadd.s32 %s257, %s258
        %s260 = smul.addr %s259, 8
        %s261 = scalar_lea.vmem %s3, %s260
        %s262 = smul.u32 8, %s19
      $region32: #{grid2d_forward_pallas.2} parent=19 // pred_fallthru
        _
    $region20: #{grid2d_forward_pallas.2} parent=5 // pred_fallthru
      _
    %p263 = scmp.le.s32.totalorder 1, %s10
    %p264 = scmp.lt.s32.totalorder %s10, 9
    %p265 = pnand %p263, %p264
    %p266 = pneg %p265
    // Predicated region
    $region33: #{grid2d_forward_pallas.2} parent=5 // pred_check
      _
    $region34: #{grid2d_forward_pallas.2} parent=5 // pred_check_branch
      %268 = sbr.rel (%p265) target = $region36
    $region35: #{grid2d_forward_pallas.2} parent=5 // pred_region
      %s269 = ssub.s32 %s10, 1
      %s270 = smul.u32 2, %s24
      %p271 = scmp.lt.s32.totalorder %s270, 1
      %s272 = scalar_select %p271, %s270, 1
      %s273 = smul.addr %s272, 8
      %s274 = scalar_lea.vmem %s0, %s273
      %p275 = pneg %p62
      %p276 = pneg %p59
      %s277 = smul.u32 2, %s24
      %p278 = scmp.lt.s32.totalorder %s21, 1
      %s279 = scalar_select %p278, %s21, 1
      %p280 = scmp.lt.s32.totalorder %s22, 3
      %s281 = scalar_select %p280, %s22, 3
      %p282 = scmp.lt.s32.totalorder %s277, 1
      %s283 = scalar_select %p282, %s277, 1
      %s284 = smul.addr %s281, 2
      %s285 = sadd.s32 %s283, %s284
      %s286 = smul.addr %s279, 8
      %s287 = sadd.s32 %s285, %s286
      %s288 = scalar_lea.vmem %s1, %s287
      %p289 = pneg %p92
      %p290 = pneg %p89
      %s291 = smul.u32 8, %s23
      %p292 = scmp.lt.s32.totalorder %s21, 1
      %s293 = scalar_select %p292, %s21, 1
      %p294 = scmp.lt.s32.totalorder %s22, 3
      %s295 = scalar_select %p294, %s22, 3
      %p296 = scmp.lt.s32.totalorder %s291, 7
      %s297 = scalar_select %p296, %s291, 7
      %s298 = smul.addr %s295, 8
      %s299 = sadd.s32 %s297, %s298
      %s300 = smul.addr %s293, 32
      %s301 = sadd.s32 %s299, %s300
      %s302 = smul.addr %s301, 8
      %s303 = scalar_lea.vmem %s2, %s302
      %p304 = pneg %p122
      %p305 = pneg %p119
      %s306 = smul.u32 8, %s23
      %p307 = scmp.lt.s32.totalorder %s21, 1
      %s308 = scalar_select %p307, %s21, 1
      %p309 = scmp.lt.s32.totalorder %s22, 3
      %s310 = scalar_select %p309, %s22, 3
      %p311 = scmp.lt.s32.totalorder %s306, 7
      %s312 = scalar_select %p311, %s306, 7
      %s313 = smul.addr %s312, 6
      %s314 = smul.addr %s310, 48
      %s315 = sadd.s32 %s313, %s314
      %s316 = smul.addr %s308, 192
      %s317 = sadd.s32 %s315, %s316
      %s318 = smul.addr %s317, 8
      %s319 = scalar_lea.vmem %s3, %s318
      %p320 = pneg %p152
      %p321 = pneg %p149
      %p322 = pneg %p184
      %p323 = pneg %p181
      %s324 = smul.u32 8, %s23
      %s325 = smul.u32 2, %s24
      %p326 = scmp.lt.s32.totalorder %s21, 1
      %s327 = scalar_select %p326, %s21, 1
      %p328 = scmp.lt.s32.totalorder %s22, 3
      %s329 = scalar_select %p328, %s22, 3
      %p330 = scmp.lt.s32.totalorder %s324, 7
      %s331 = scalar_select %p330, %s324, 7
      %p332 = scmp.lt.s32.totalorder %s325, 1
      %s333 = scalar_select %p332, %s325, 1
      %s334 = smul.addr %s331, 2
      %s335 = sadd.s32 %s333, %s334
      %s336 = smul.addr %s329, 16
      %s337 = sadd.s32 %s335, %s336
      %s338 = smul.addr %s327, 64
      %s339 = sadd.s32 %s337, %s338
      %s340 = smul.addr %s339, 8
      %s341 = scalar_lea.vmem %s4, %s340
      %s342 = smul.u32 2, %s24
      %p343 = scmp.lt.s32.totalorder %s342, 1
      %s344 = scalar_select %p343, %s342, 1
      %s345 = smul.addr %s344, 8
      %s346 = scalar_lea.vmem %s0, %s345
      %s347 = smul.u32 2, %s24
      %s348 = smul.u32 2, %s24
      %p349 = scmp.lt.s32.totalorder %s21, 1
      %s350 = scalar_select %p349, %s21, 1
      %p351 = scmp.lt.s32.totalorder %s22, 3
      %s352 = scalar_select %p351, %s22, 3
      %p353 = scmp.lt.s32.totalorder %s348, 1
      %s354 = scalar_select %p353, %s348, 1
      %s355 = smul.addr %s352, 2
      %s356 = sadd.s32 %s354, %s355
      %s357 = smul.addr %s350, 8
      %s358 = sadd.s32 %s356, %s357
      %s359 = scalar_lea.vmem %s1, %s358
      %s360 = smul.u32 2, %s24
      %s361 = smul.u32 8, %s23
      %p362 = scmp.lt.s32.totalorder %s21, 1
      %s363 = scalar_select %p362, %s21, 1
      %p364 = scmp.lt.s32.totalorder %s22, 3
      %s365 = scalar_select %p364, %s22, 3
      %p366 = scmp.lt.s32.totalorder %s361, 7
      %s367 = scalar_select %p366, %s361, 7
      %s368 = smul.addr %s365, 8
      %s369 = sadd.s32 %s367, %s368
      %s370 = smul.addr %s363, 32
      %s371 = sadd.s32 %s369, %s370
      %s372 = smul.addr %s371, 8
      %s373 = scalar_lea.vmem %s2, %s372
      %s374 = smul.u32 8, %s23
      %s375 = smul.u32 8, %s23
      %p376 = scmp.lt.s32.totalorder %s21, 1
      %s377 = scalar_select %p376, %s21, 1
      %p378 = scmp.lt.s32.totalorder %s22, 3
      %s379 = scalar_select %p378, %s22, 3
      %p380 = scmp.lt.s32.totalorder %s375, 7
      %s381 = scalar_select %p380, %s375, 7
      %s382 = smul.addr %s381, 6
      %s383 = smul.addr %s379, 48
      %s384 = sadd.s32 %s382, %s383
      %s385 = smul.addr %s377, 192
      %s386 = sadd.s32 %s384, %s385
      %s387 = smul.addr %s386, 8
      %s388 = scalar_lea.vmem %s3, %s387
      %s389 = smul.u32 8, %s23
      %s390 = smul.u32 8, %s23
      %s391 = smul.u32 2, %s24
      %p392 = scmp.lt.s32.totalorder %s21, 1
      %s393 = scalar_select %p392, %s21, 1
      %p394 = scmp.lt.s32.totalorder %s22, 3
      %s395 = scalar_select %p394, %s22, 3
      %p396 = scmp.lt.s32.totalorder %s390, 7
      %s397 = scalar_select %p396, %s390, 7
      %p398 = scmp.lt.s32.totalorder %s391, 1
      %s399 = scalar_select %p398, %s391, 1
      %s400 = smul.addr %s397, 2
      %s401 = sadd.s32 %s399, %s400
      %s402 = smul.addr %s395, 16
      %s403 = sadd.s32 %s401, %s402
      %s404 = smul.addr %s393, 64
      %s405 = sadd.s32 %s403, %s404
      %s406 = smul.addr %s405, 8
      %s407 = scalar_lea.vmem %s4, %s406
      %s408 = smul.u32 8, %s23
      %s409 = smul.u32 2, %s24
      %v410 = vld [vmem:[%s388] sm:$0xff]
      %v411 = vld [vmem:[%s388 + $0x8] sm:$0xff]
      %v412 = vld [vmem:[%s388 + $0x10] sm:$0xff]
      %v413 = vld [vmem:[%s388 + $0x18] sm:$0xff]
      %v414 = vld [vmem:[%s388 + $0x20] sm:$0xff]
      %v415 = vld [vmem:[%s388 + $0x28] sm:$0xff]
      %v416 = vld [vmem:[%s388 + $0x30] sm:$0xff]
      %v417 = vld [vmem:[%s388 + $0x38] sm:$0xff]
      %v418 = vld [vmem:[%s388 + $0x40] sm:$0xff]
      %v419 = vld [vmem:[%s388 + $0x48] sm:$0xff]
      %v420 = vld [vmem:[%s388 + $0x50] sm:$0xff]
      %v421 = vld [vmem:[%s388 + $0x58] sm:$0xff]
      %v422 = vld [vmem:[%s388 + $0x60] sm:$0xff]
      %v423 = vld [vmem:[%s388 + $0x68] sm:$0xff]
      %v424 = vld [vmem:[%s388 + $0x70] sm:$0xff]
      %v425 = vld [vmem:[%s388 + $0x78] sm:$0xff]
      %v426 = vld [vmem:[%s388 + $0x80] sm:$0xff]
      %v427 = vld [vmem:[%s388 + $0x88] sm:$0xff]
      %v428 = vld [vmem:[%s388 + $0x90] sm:$0xff]
      %v429 = vld [vmem:[%s388 + $0x98] sm:$0xff]
      %v430 = vld [vmem:[%s388 + $0xa0] sm:$0xff]
      %v431 = vld [vmem:[%s388 + $0xa8] sm:$0xff]
      %v432 = vld [vmem:[%s388 + $0xb0] sm:$0xff]
      %v433 = vld [vmem:[%s388 + $0xb8] sm:$0xff]
      %v434 = vld [vmem:[%s388 + $0xc0] sm:$0xff]
      %v435 = vld [vmem:[%s388 + $0xc8] sm:$0xff]
      %v436 = vld [vmem:[%s388 + $0xd0] sm:$0xff]
      %v437 = vld [vmem:[%s388 + $0xd8] sm:$0xff]
      %v438 = vld [vmem:[%s388 + $0xe0] sm:$0xff]
      %v439 = vld [vmem:[%s388 + $0xe8] sm:$0xff]
      %v440 = vld [vmem:[%s388 + $0xf0] sm:$0xff]
      %v441 = vld [vmem:[%s388 + $0xf8] sm:$0xff]
      %v442 = vld [vmem:[%s388 + $0x100] sm:$0xff]
      %v443 = vld [vmem:[%s388 + $0x108] sm:$0xff]
      %v444 = vld [vmem:[%s388 + $0x110] sm:$0xff]
      %v445 = vld [vmem:[%s388 + $0x118] sm:$0xff]
      %v446 = vld [vmem:[%s388 + $0x120] sm:$0xff]
      %v447 = vld [vmem:[%s388 + $0x128] sm:$0xff]
      %v448 = vld [vmem:[%s388 + $0x130] sm:$0xff]
      %v449 = vld [vmem:[%s388 + $0x138] sm:$0xff]
      %v450 = vld [vmem:[%s388 + $0x140] sm:$0xff]
      %v451 = vld [vmem:[%s388 + $0x148] sm:$0xff]
      %v452 = vld [vmem:[%s388 + $0x150] sm:$0xff]
      %v453 = vld [vmem:[%s388 + $0x158] sm:$0xff]
      %v454 = vld [vmem:[%s388 + $0x160] sm:$0xff]
      %v455 = vld [vmem:[%s388 + $0x168] sm:$0xff]
      %v456 = vld [vmem:[%s388 + $0x170] sm:$0xff]
      %v457 = vld [vmem:[%s388 + $0x178] sm:$0xff]
      %v458 = vld [vmem:[%s346] sm:$0xff]
      %v459 = vld [vmem:[%s346 + $0x8] sm:$0xff]
      %v460 = vld [vmem:[%s346 + $0x10] sm:$0xff]
      %v461 = vld [vmem:[%s346 + $0x18] sm:$0xff]
      %v462 = vld [vmem:[%s346 + $0x20] sm:$0xff]
      %v463 = vld [vmem:[%s346 + $0x28] sm:$0xff]
      %v464 = vld [vmem:[%s346 + $0x30] sm:$0xff]
      %v465 = vld [vmem:[%s346 + $0x38] sm:$0xff]
      %v466 = vld [vmem:[%s346 + $0x40] sm:$0xff]
      %v467 = vld [vmem:[%s346 + $0x48] sm:$0xff]
      %v468 = vld [vmem:[%s346 + $0x50] sm:$0xff]
      %v469 = vld [vmem:[%s346 + $0x58] sm:$0xff]
      %v470 = vld [vmem:[%s346 + $0x60] sm:$0xff]
      %v471 = vld [vmem:[%s346 + $0x68] sm:$0xff]
      %v472 = vld [vmem:[%s346 + $0x70] sm:$0xff]
      %v473 = vld [vmem:[%s346 + $0x78] sm:$0xff]
      %v474 = vld [vmem:[%s346 + $0x80] sm:$0xff]
      %v475 = vld [vmem:[%s346 + $0x88] sm:$0xff]
      %v476 = vld [vmem:[%s346 + $0x90] sm:$0xff]
      %v477 = vld [vmem:[%s346 + $0x98] sm:$0xff]
      %v478 = vld [vmem:[%s346 + $0xa0] sm:$0xff]
      %v479 = vld [vmem:[%s346 + $0xa8] sm:$0xff]
      %v480 = vld [vmem:[%s346 + $0xb0] sm:$0xff]
      %v481 = vld [vmem:[%s346 + $0xb8] sm:$0xff]
      %v482 = vld [vmem:[%s346 + $0xc0] sm:$0xff]
      %v483 = vld [vmem:[%s346 + $0xc8] sm:$0xff]
      %v484 = vld [vmem:[%s346 + $0xd0] sm:$0xff]
      %v485 = vld [vmem:[%s346 + $0xd8] sm:$0xff]
      %v486 = vld [vmem:[%s346 + $0xe0] sm:$0xff]
      %v487 = vld [vmem:[%s346 + $0xe8] sm:$0xff]
      %v488 = vld [vmem:[%s346 + $0xf0] sm:$0xff]
      %v489 = vld [vmem:[%s346 + $0xf8] sm:$0xff]
      %v490 = vld [vmem:[%s346 + $0x100] sm:$0xff]
      %v491 = vld [vmem:[%s346 + $0x108] sm:$0xff]
      %v492 = vld [vmem:[%s346 + $0x110] sm:$0xff]
      %v493 = vld [vmem:[%s346 + $0x118] sm:$0xff]
      %v494 = vld [vmem:[%s346 + $0x120] sm:$0xff]
      %v495 = vld [vmem:[%s346 + $0x128] sm:$0xff]
      %v496 = vld [vmem:[%s346 + $0x130] sm:$0xff]
      %v497 = vld [vmem:[%s346 + $0x138] sm:$0xff]
      %v498 = vld [vmem:[%s346 + $0x140] sm:$0xff]
      %v499 = vld [vmem:[%s346 + $0x148] sm:$0xff]
      %v500 = vld [vmem:[%s346 + $0x150] sm:$0xff]
      %v501 = vld [vmem:[%s346 + $0x158] sm:$0xff]
      %v502 = vld [vmem:[%s346 + $0x160] sm:$0xff]
      %v503 = vld [vmem:[%s346 + $0x168] sm:$0xff]
      %v504 = vld [vmem:[%s346 + $0x170] sm:$0xff]
      %v505 = vld [vmem:[%s346 + $0x178] sm:$0xff]
      %v506 = vld [vmem:[%s346 + $0x180] sm:$0xff]
      %v507 = vld [vmem:[%s346 + $0x188] sm:$0xff]
      %v508 = vld [vmem:[%s346 + $0x190] sm:$0xff]
      %v509 = vld [vmem:[%s346 + $0x198] sm:$0xff]
      %v510 = vld [vmem:[%s346 + $0x1a0] sm:$0xff]
      %v511 = vld [vmem:[%s346 + $0x1a8] sm:$0xff]
      %v512 = vld [vmem:[%s346 + $0x1b0] sm:$0xff]
      %v513 = vld [vmem:[%s346 + $0x1b8] sm:$0xff]
      %v514 = vld [vmem:[%s346 + $0x1c0] sm:$0xff]
      %v515 = vld [vmem:[%s346 + $0x1c8] sm:$0xff]
      %v516 = vld [vmem:[%s346 + $0x1d0] sm:$0xff]
      %v517 = vld [vmem:[%s346 + $0x1d8] sm:$0xff]
      %v518 = vld [vmem:[%s346 + $0x1e0] sm:$0xff]
      %v519 = vld [vmem:[%s346 + $0x1e8] sm:$0xff]
      %v520 = vld [vmem:[%s346 + $0x1f0] sm:$0xff]
      %v521 = vld [vmem:[%s346 + $0x1f8] sm:$0xff]
      %v522 = vld [vmem:[%s346 + $0x200] sm:$0xff]
      %v523 = vld [vmem:[%s346 + $0x208] sm:$0xff]
      %v524 = vld [vmem:[%s346 + $0x210] sm:$0xff]
      %v525 = vld [vmem:[%s346 + $0x218] sm:$0xff]
      %v526 = vld [vmem:[%s346 + $0x220] sm:$0xff]
      %v527 = vld [vmem:[%s346 + $0x228] sm:$0xff]
      %v528 = vld [vmem:[%s346 + $0x230] sm:$0xff]
      %v529 = vld [vmem:[%s346 + $0x238] sm:$0xff]
      %v530 = vld [vmem:[%s346 + $0x240] sm:$0xff]
      %v531 = vld [vmem:[%s346 + $0x248] sm:$0xff]
      %v532 = vld [vmem:[%s346 + $0x250] sm:$0xff]
      %v533 = vld [vmem:[%s346 + $0x258] sm:$0xff]
      %v534 = vld [vmem:[%s346 + $0x260] sm:$0xff]
      %v535 = vld [vmem:[%s346 + $0x268] sm:$0xff]
      %v536 = vld [vmem:[%s346 + $0x270] sm:$0xff]
      %v537 = vld [vmem:[%s346 + $0x278] sm:$0xff]
      %v538 = vld [vmem:[%s346 + $0x280] sm:$0xff]
      %v539 = vld [vmem:[%s346 + $0x288] sm:$0xff]
      %v540 = vld [vmem:[%s346 + $0x290] sm:$0xff]
      %v541 = vld [vmem:[%s346 + $0x298] sm:$0xff]
      %v542 = vld [vmem:[%s346 + $0x2a0] sm:$0xff]
      %v543 = vld [vmem:[%s346 + $0x2a8] sm:$0xff]
      %v544 = vld [vmem:[%s346 + $0x2b0] sm:$0xff]
      %v545 = vld [vmem:[%s346 + $0x2b8] sm:$0xff]
      %v546 = vld [vmem:[%s346 + $0x2c0] sm:$0xff]
      %v547 = vld [vmem:[%s346 + $0x2c8] sm:$0xff]
      %v548 = vld [vmem:[%s346 + $0x2d0] sm:$0xff]
      %v549 = vld [vmem:[%s346 + $0x2d8] sm:$0xff]
      %v550 = vld [vmem:[%s346 + $0x2e0] sm:$0xff]
      %v551 = vld [vmem:[%s346 + $0x2e8] sm:$0xff]
      %v552 = vld [vmem:[%s346 + $0x2f0] sm:$0xff]
      %v553 = vld [vmem:[%s346 + $0x2f8] sm:$0xff]
      %v554 = vld [vmem:[%s346 + $0x300] sm:$0xff]
      %v555 = vld [vmem:[%s346 + $0x308] sm:$0xff]
      %v556 = vld [vmem:[%s346 + $0x310] sm:$0xff]
      %v557 = vld [vmem:[%s346 + $0x318] sm:$0xff]
      %v558 = vld [vmem:[%s346 + $0x320] sm:$0xff]
      %v559 = vld [vmem:[%s346 + $0x328] sm:$0xff]
      %v560 = vld [vmem:[%s346 + $0x330] sm:$0xff]
      %v561 = vld [vmem:[%s346 + $0x338] sm:$0xff]
      %v562 = vld [vmem:[%s346 + $0x340] sm:$0xff]
      %v563 = vld [vmem:[%s346 + $0x348] sm:$0xff]
      %v564 = vld [vmem:[%s346 + $0x350] sm:$0xff]
      %v565 = vld [vmem:[%s346 + $0x358] sm:$0xff]
      %v566 = vld [vmem:[%s346 + $0x360] sm:$0xff]
      %v567 = vld [vmem:[%s346 + $0x368] sm:$0xff]
      %v568 = vld [vmem:[%s346 + $0x370] sm:$0xff]
      %v569 = vld [vmem:[%s346 + $0x378] sm:$0xff]
      %v570 = vld [vmem:[%s346 + $0x380] sm:$0xff]
      %v571 = vld [vmem:[%s346 + $0x388] sm:$0xff]
      %v572 = vld [vmem:[%s346 + $0x390] sm:$0xff]
      %v573 = vld [vmem:[%s346 + $0x398] sm:$0xff]
      %v574 = vld [vmem:[%s346 + $0x3a0] sm:$0xff]
      %v575 = vld [vmem:[%s346 + $0x3a8] sm:$0xff]
      %v576 = vld [vmem:[%s346 + $0x3b0] sm:$0xff]
      %v577 = vld [vmem:[%s346 + $0x3b8] sm:$0xff]
      %v578 = vld [vmem:[%s346 + $0x3c0] sm:$0xff]
      %v579 = vld [vmem:[%s346 + $0x3c8] sm:$0xff]
      %v580 = vld [vmem:[%s346 + $0x3d0] sm:$0xff]
      %v581 = vld [vmem:[%s346 + $0x3d8] sm:$0xff]
      %v582 = vld [vmem:[%s346 + $0x3e0] sm:$0xff]
      %v583 = vld [vmem:[%s346 + $0x3e8] sm:$0xff]
      %v584 = vld [vmem:[%s346 + $0x3f0] sm:$0xff]
      %v585 = vld [vmem:[%s346 + $0x3f8] sm:$0xff]
      %v586 = vld [vmem:[%s346 + $0x400] sm:$0xff]
      %v587 = vld [vmem:[%s346 + $0x408] sm:$0xff]
      %v588 = vld [vmem:[%s346 + $0x410] sm:$0xff]
      %v589 = vld [vmem:[%s346 + $0x418] sm:$0xff]
      %v590 = vld [vmem:[%s346 + $0x420] sm:$0xff]
      %v591 = vld [vmem:[%s346 + $0x428] sm:$0xff]
      %v592 = vld [vmem:[%s346 + $0x430] sm:$0xff]
      %v593 = vld [vmem:[%s346 + $0x438] sm:$0xff]
      %v594 = vld [vmem:[%s346 + $0x440] sm:$0xff]
      %v595 = vld [vmem:[%s346 + $0x448] sm:$0xff]
      %v596 = vld [vmem:[%s346 + $0x450] sm:$0xff]
      %v597 = vld [vmem:[%s346 + $0x458] sm:$0xff]
      %v598 = vld [vmem:[%s346 + $0x460] sm:$0xff]
      %v599 = vld [vmem:[%s346 + $0x468] sm:$0xff]
      %v600 = vld [vmem:[%s346 + $0x470] sm:$0xff]
      %v601 = vld [vmem:[%s346 + $0x478] sm:$0xff]
      %v602 = vld [vmem:[%s346 + $0x480] sm:$0xff]
      %v603 = vld [vmem:[%s346 + $0x488] sm:$0xff]
      %v604 = vld [vmem:[%s346 + $0x490] sm:$0xff]
      %v605 = vld [vmem:[%s346 + $0x498] sm:$0xff]
      %v606 = vld [vmem:[%s346 + $0x4a0] sm:$0xff]
      %v607 = vld [vmem:[%s346 + $0x4a8] sm:$0xff]
      %v608 = vld [vmem:[%s346 + $0x4b0] sm:$0xff]
      %v609 = vld [vmem:[%s346 + $0x4b8] sm:$0xff]
      %v610 = vld [vmem:[%s346 + $0x4c0] sm:$0xff]
      %v611 = vld [vmem:[%s346 + $0x4c8] sm:$0xff]
      %v612 = vld [vmem:[%s346 + $0x4d0] sm:$0xff]
      %v613 = vld [vmem:[%s346 + $0x4d8] sm:$0xff]
      %v614 = vld [vmem:[%s346 + $0x4e0] sm:$0xff]
      %v615 = vld [vmem:[%s346 + $0x4e8] sm:$0xff]
      %v616 = vld [vmem:[%s346 + $0x4f0] sm:$0xff]
      %v617 = vld [vmem:[%s346 + $0x4f8] sm:$0xff]
      %v618 = vld [vmem:[%s346 + $0x500] sm:$0xff]
      %v619 = vld [vmem:[%s346 + $0x508] sm:$0xff]
      %v620 = vld [vmem:[%s346 + $0x510] sm:$0xff]
      %v621 = vld [vmem:[%s346 + $0x518] sm:$0xff]
      %v622 = vld [vmem:[%s346 + $0x520] sm:$0xff]
      %v623 = vld [vmem:[%s346 + $0x528] sm:$0xff]
      %v624 = vld [vmem:[%s346 + $0x530] sm:$0xff]
      %v625 = vld [vmem:[%s346 + $0x538] sm:$0xff]
      %v626 = vld [vmem:[%s346 + $0x540] sm:$0xff]
      %v627 = vld [vmem:[%s346 + $0x548] sm:$0xff]
      %v628 = vld [vmem:[%s346 + $0x550] sm:$0xff]
      %v629 = vld [vmem:[%s346 + $0x558] sm:$0xff]
      %v630 = vld [vmem:[%s346 + $0x560] sm:$0xff]
      %v631 = vld [vmem:[%s346 + $0x568] sm:$0xff]
      %v632 = vld [vmem:[%s346 + $0x570] sm:$0xff]
      %v633 = vld [vmem:[%s346 + $0x578] sm:$0xff]
      %v634 = vld [vmem:[%s346 + $0x580] sm:$0xff]
      %v635 = vld [vmem:[%s346 + $0x588] sm:$0xff]
      %v636 = vld [vmem:[%s346 + $0x590] sm:$0xff]
      %v637 = vld [vmem:[%s346 + $0x598] sm:$0xff]
      %v638 = vld [vmem:[%s346 + $0x5a0] sm:$0xff]
      %v639 = vld [vmem:[%s346 + $0x5a8] sm:$0xff]
      %v640 = vld [vmem:[%s346 + $0x5b0] sm:$0xff]
      %v641 = vld [vmem:[%s346 + $0x5b8] sm:$0xff]
      %v642 = vld [vmem:[%s346 + $0x5c0] sm:$0xff]
      %v643 = vld [vmem:[%s346 + $0x5c8] sm:$0xff]
      %v644 = vld [vmem:[%s346 + $0x5d0] sm:$0xff]
      %v645 = vld [vmem:[%s346 + $0x5d8] sm:$0xff]
      %v646 = vld [vmem:[%s346 + $0x5e0] sm:$0xff]
      %v647 = vld [vmem:[%s346 + $0x5e8] sm:$0xff]
      %v648 = vld [vmem:[%s346 + $0x5f0] sm:$0xff]
      %v649 = vld [vmem:[%s346 + $0x5f8] sm:$0xff]
      %v650 = vld [vmem:[%s359] sm:$0x3]
      %v652 = vlaneseq
      %v653 = vshrl.u32 %v652, 7
      %v654 = vsub.s32 0, %v653
      %v655 = vrot.slane %v650, %v654
      %v656 = vlaneseq
      %v657 = vshrl.u32 %v656, 7
      %v658 = vsub.s32 1, %v657
      %v659 = vrot.slane %v650, %v658
      %662 = vmatprep.subr.mxu0 %v459
      %663 = vmatpush1.msra.mxu0 %v458
      %664 = vmatprep.subr.mxu0 %v461
      %665 = vmatpush1.msra.mxu0 %v460
      %666 = vmatprep.subr.mxu0 %v463
      %667 = vmatpush1.msra.mxu0 %v462
      %668 = vmatprep.subr.mxu0 %v465
      %669 = vmatpush1.msra.mxu0 %v464
      %670 = vmatprep.subr.mxu0 %v467
      %671 = vmatpush1.msra.mxu0 %v466
      %672 = vmatprep.subr.mxu0 %v469
      %673 = vmatpush1.msra.mxu0 %v468
      %674 = vmatprep.subr.mxu0 %v471
      %675 = vmatpush1.msra.mxu0 %v470
      %676 = vmatprep.subr.mxu0 %v473
      %677 = vmatpush1.msra.mxu0 %v472
      %678 = vmatprep.subr.mxu0 %v475
      %679 = vmatpush1.msra.mxu0 %v474
      %680 = vmatprep.subr.mxu0 %v477
      %681 = vmatpush1.msra.mxu0 %v476
      %682 = vmatprep.subr.mxu0 %v479
      %683 = vmatpush1.msra.mxu0 %v478
      %684 = vmatprep.subr.mxu0 %v481
      %685 = vmatpush1.msra.mxu0 %v480
      %686 = vmatprep.subr.mxu0 %v483
      %687 = vmatpush1.msra.mxu0 %v482
      %688 = vmatprep.subr.mxu0 %v485
      %689 = vmatpush1.msra.mxu0 %v484
      %690 = vmatprep.subr.mxu0 %v487
      %691 = vmatpush1.msra.mxu0 %v486
      %692 = vmatprep.subr.mxu0 %v489
      %693 = vmatpush1.msra.mxu0 %v488
      %694 = vmatprep.subr.mxu0 %v491
      %695 = vmatpush1.msra.mxu0 %v490
      %696 = vmatprep.subr.mxu0 %v493
      %697 = vmatpush1.msra.mxu0 %v492
      %698 = vmatprep.subr.mxu0 %v495
      %699 = vmatpush1.msra.mxu0 %v494
      %700 = vmatprep.subr.mxu0 %v497
      %701 = vmatpush1.msra.mxu0 %v496
      %702 = vmatprep.subr.mxu0 %v499
      %703 = vmatpush1.msra.mxu0 %v498
      %704 = vmatprep.subr.mxu0 %v501
      %705 = vmatpush1.msra.mxu0 %v500
      %706 = vmatprep.subr.mxu0 %v503
      %707 = vmatpush1.msra.mxu0 %v502
      %708 = vmatprep.subr.mxu0 %v505
      %709 = vmatpush1.msra.mxu0 %v504
      %710 = vmatprep.subr.mxu0 %v507
      %711 = vmatpush1.msra.mxu0 %v506
      %712 = vmatprep.subr.mxu0 %v509
      %713 = vmatpush1.msra.mxu0 %v508
      %714 = vmatprep.subr.mxu0 %v511
      %715 = vmatpush1.msra.mxu0 %v510
      %716 = vmatprep.subr.mxu0 %v513
      %717 = vmatpush1.msra.mxu0 %v512
      %718 = vmatprep.subr.mxu0 %v515
      %719 = vmatpush1.msra.mxu0 %v514
      %720 = vmatprep.subr.mxu0 %v517
      %721 = vmatpush1.msra.mxu0 %v516
      %722 = vmatprep.subr.mxu0 %v519
      %723 = vmatpush1.msra.mxu0 %v518
      %724 = vmatprep.subr.mxu0 %v521
      %725 = vmatpush1.msra.mxu0 %v520
      %726 = vmatprep.mubr.f32.mxu0 %v411
      %727 = vmatmul.mubr.f32.gmra.mrb[0].mxu0 %v410
      %v728 = vpop.f32.mrb[0].mxu0
      %v729 = vadd.f32 %v655, %v728
      %v730 = vpop.f32.mrb[0].mxu0
      %v731 = vadd.f32 %v659, %v730
      %732 = vmatprep.mubr.f32.mxu0 %v417
      %733 = vmatmul.mubr.f32.gmra.mrb[0].mxu0 %v416
      %v734 = vpop.f32.mrb[0].mxu0
      %v735 = vadd.f32 %v655, %v734
      %v736 = vpop.f32.mrb[0].mxu0
      %v737 = vadd.f32 %v659, %v736
      %738 = vmatprep.mubr.f32.mxu0 %v423
      %739 = vmatmul.mubr.f32.gmra.mrb[0].mxu0 %v422
      %v740 = vpop.f32.mrb[0].mxu0
      %v741 = vadd.f32 %v655, %v740
      %v742 = vpop.f32.mrb[0].mxu0
      %v743 = vadd.f32 %v659, %v742
      %744 = vmatprep.mubr.f32.mxu0 %v429
      %745 = vmatmul.mubr.f32.gmra.mrb[0].mxu0 %v428
      %v746 = vpop.f32.mrb[0].mxu0
      %v747 = vadd.f32 %v655, %v746
      %v748 = vpop.f32.mrb[0].mxu0
      %v749 = vadd.f32 %v659, %v748
      %750 = vmatprep.mubr.f32.mxu0 %v435
      %751 = vmatmul.mubr.f32.gmra.mrb[0].mxu0 %v434
      %v752 = vpop.f32.mrb[0].mxu0
      %v753 = vadd.f32 %v655, %v752
      %v754 = vpop.f32.mrb[0].mxu0
      %v755 = vadd.f32 %v659, %v754
      %756 = vmatprep.mubr.f32.mxu0 %v441
      %757 = vmatmul.mubr.f32.gmra.mrb[0].mxu0 %v440
      %v758 = vpop.f32.mrb[0].mxu0
      %v759 = vadd.f32 %v655, %v758
      %v760 = vpop.f32.mrb[0].mxu0
      %v761 = vadd.f32 %v659, %v760
      %762 = vmatprep.mubr.f32.mxu0 %v447
      %763 = vmatmul.mubr.f32.gmra.mrb[0].mxu0 %v446
      %v764 = vpop.f32.mrb[0].mxu0
      %v765 = vadd.f32 %v655, %v764
      %v766 = vpop.f32.mrb[0].mxu0
      %v767 = vadd.f32 %v659, %v766
      %768 = vmatprep.mubr.f32.mxu0 %v453
      %769 = vmatmul.mubr.f32.gmra.mrb[0].mxu0 %v452
      %v770 = vpop.f32.mrb[0].mxu0
      %v771 = vadd.f32 %v655, %v770
      %v772 = vpop.f32.mrb[0].mxu0
      %v773 = vadd.f32 %v659, %v772
      %774 = vdwg.mxu0
      %775 = vmatprep.subr.mxu0 %v523
      %776 = vmatpush1.msra.mxu0 %v522
      %777 = vmatprep.subr.mxu0 %v525
      %778 = vmatpush1.msra.mxu0 %v524
      %779 = vmatprep.subr.mxu0 %v527
      %780 = vmatpush1.msra.mxu0 %v526
      %781 = vmatprep.subr.mxu0 %v529
      %782 = vmatpush1.msra.mxu0 %v528
      %783 = vmatprep.subr.mxu0 %v531
      %784 = vmatpush1.msra.mxu0 %v530
      %785 = vmatprep.subr.mxu0 %v533
      %786 = vmatpush1.msra.mxu0 %v532
      %787 = vmatprep.subr.mxu0 %v535
      %788 = vmatpush1.msra.mxu0 %v534
      %789 = vmatprep.subr.mxu0 %v537
      %790 = vmatpush1.msra.mxu0 %v536
      %791 = vmatprep.subr.mxu0 %v539
      %792 = vmatpush1.msra.mxu0 %v538
      %793 = vmatprep.subr.mxu0 %v541
      %794 = vmatpush1.msra.mxu0 %v540
      %795 = vmatprep.subr.mxu0 %v543
      %796 = vmatpush1.msra.mxu0 %v542
      %797 = vmatprep.subr.mxu0 %v545
      %798 = vmatpush1.msra.mxu0 %v544
      %799 = vmatprep.subr.mxu0 %v547
      %800 = vmatpush1.msra.mxu0 %v546
      %801 = vmatprep.subr.mxu0 %v549
      %802 = vmatpush1.msra.mxu0 %v548
      %803 = vmatprep.subr.mxu0 %v551
      %804 = vmatpush1.msra.mxu0 %v550
      %805 = vmatprep.subr.mxu0 %v553
      %806 = vmatpush1.msra.mxu0 %v552
      %807 = vmatprep.subr.mxu0 %v555
      %808 = vmatpush1.msra.mxu0 %v554
      %809 = vmatprep.subr.mxu0 %v557
      %810 = vmatpush1.msra.mxu0 %v556
      %811 = vmatprep.subr.mxu0 %v559
      %812 = vmatpush1.msra.mxu0 %v558
      %813 = vmatprep.subr.mxu0 %v561
      %814 = vmatpush1.msra.mxu0 %v560
      %815 = vmatprep.subr.mxu0 %v563
      %816 = vmatpush1.msra.mxu0 %v562
      %817 = vmatprep.subr.mxu0 %v565
      %818 = vmatpush1.msra.mxu0 %v564
      %819 = vmatprep.subr.mxu0 %v567
      %820 = vmatpush1.msra.mxu0 %v566
      %821 = vmatprep.subr.mxu0 %v569
      %822 = vmatpush1.msra.mxu0 %v568
      %823 = vmatprep.subr.mxu0 %v571
      %824 = vmatpush1.msra.mxu0 %v570
      %825 = vmatprep.subr.mxu0 %v573
      %826 = vmatpush1.msra.mxu0 %v572
      %827 = vmatprep.subr.mxu0 %v575
      %828 = vmatpush1.msra.mxu0 %v574
      %829 = vmatprep.subr.mxu0 %v577
      %830 = vmatpush1.msra.mxu0 %v576
      %831 = vmatprep.subr.mxu0 %v579
      %832 = vmatpush1.msra.mxu0 %v578
      %833 = vmatprep.subr.mxu0 %v581
      %834 = vmatpush1.msra.mxu0 %v580
      %835 = vmatprep.subr.mxu0 %v583
      %836 = vmatpush1.msra.mxu0 %v582
      %837 = vmatprep.subr.mxu0 %v585
      %838 = vmatpush1.msra.mxu0 %v584
      %839 = vmatprep.mubr.f32.mxu0 %v413
      %840 = vmatmul.mubr.f32.gmra.mrb[0].mxu0 %v412
      %v841 = vpop.f32.mrb[0].mxu0
      %v842 = vadd.f32 %v729, %v841
      %v843 = vpop.f32.mrb[0].mxu0
      %v844 = vadd.f32 %v731, %v843
      %845 = vmatprep.mubr.f32.mxu0 %v419
      %846 = vmatmul.mubr.f32.gmra.mrb[0].mxu0 %v418
      %v847 = vpop.f32.mrb[0].mxu0
      %v848 = vadd.f32 %v735, %v847
      %v849 = vpop.f32.mrb[0].mxu0
      %v850 = vadd.f32 %v737, %v849
      %851 = vmatprep.mubr.f32.mxu0 %v425
      %852 = vmatmul.mubr.f32.gmra.mrb[0].mxu0 %v424
      %v853 = vpop.f32.mrb[0].mxu0
      %v854 = vadd.f32 %v741, %v853
      %v855 = vpop.f32.mrb[0].mxu0
      %v856 = vadd.f32 %v743, %v855
      %857 = vmatprep.mubr.f32.mxu0 %v431
      %858 = vmatmul.mubr.f32.gmra.mrb[0].mxu0 %v430
      %v859 = vpop.f32.mrb[0].mxu0
      %v860 = vadd.f32 %v747, %v859
      %v861 = vpop.f32.mrb[0].mxu0
      %v862 = vadd.f32 %v749, %v861
      %863 = vmatprep.mubr.f32.mxu0 %v437
      %864 = vmatmul.mubr.f32.gmra.mrb[0].mxu0 %v436
      %v865 = vpop.f32.mrb[0].mxu0
      %v866 = vadd.f32 %v753, %v865
      %v867 = vpop.f32.mrb[0].mxu0
      %v868 = vadd.f32 %v755, %v867
      %869 = vmatprep.mubr.f32.mxu0 %v443
      %870 = vmatmul.mubr.f32.gmra.mrb[0].mxu0 %v442
      %v871 = vpop.f32.mrb[0].mxu0
      %v872 = vadd.f32 %v759, %v871
      %v873 = vpop.f32.mrb[0].mxu0
      %v874 = vadd.f32 %v761, %v873
      %875 = vmatprep.mubr.f32.mxu0 %v449
      %876 = vmatmul.mubr.f32.gmra.mrb[0].mxu0 %v448
      %v877 = vpop.f32.mrb[0].mxu0
      %v878 = vadd.f32 %v765, %v877
      %v879 = vpop.f32.mrb[0].mxu0
      %v880 = vadd.f32 %v767, %v879
      %881 = vmatprep.mubr.f32.mxu0 %v455
      %882 = vmatmul.mubr.f32.gmra.mrb[0].mxu0 %v454
      %v883 = vpop.f32.mrb[0].mxu0
      %v884 = vadd.f32 %v771, %v883
      %v885 = vpop.f32.mrb[0].mxu0
      %v886 = vadd.f32 %v773, %v885
      %887 = vdwg.mxu0
      %888 = vmatprep.subr.mxu0 %v587
      %889 = vmatpush1.msra.mxu0 %v586
      %890 = vmatprep.subr.mxu0 %v589
      %891 = vmatpush1.msra.mxu0 %v588
      %892 = vmatprep.subr.mxu0 %v591
      %893 = vmatpush1.msra.mxu0 %v590
      %894 = vmatprep.subr.mxu0 %v593
      %895 = vmatpush1.msra.mxu0 %v592
      %896 = vmatprep.subr.mxu0 %v595
      %897 = vmatpush1.msra.mxu0 %v594
      %898 = vmatprep.subr.mxu0 %v597
      %899 = vmatpush1.msra.mxu0 %v596
      %900 = vmatprep.subr.mxu0 %v599
      %901 = vmatpush1.msra.mxu0 %v598
      %902 = vmatprep.subr.mxu0 %v601
      %903 = vmatpush1.msra.mxu0 %v600
      %904 = vmatprep.subr.mxu0 %v603
      %905 = vmatpush1.msra.mxu0 %v602
      %906 = vmatprep.subr.mxu0 %v605
      %907 = vmatpush1.msra.mxu0 %v604
      %908 = vmatprep.subr.mxu0 %v607
      %909 = vmatpush1.msra.mxu0 %v606
      %910 = vmatprep.subr.mxu0 %v609
      %911 = vmatpush1.msra.mxu0 %v608
      %912 = vmatprep.subr.mxu0 %v611
      %913 = vmatpush1.msra.mxu0 %v610
      %914 = vmatprep.subr.mxu0 %v613
      %915 = vmatpush1.msra.mxu0 %v612
      %916 = vmatprep.subr.mxu0 %v615
      %917 = vmatpush1.msra.mxu0 %v614
      %918 = vmatprep.subr.mxu0 %v617
      %919 = vmatpush1.msra.mxu0 %v616
      %920 = vmatprep.subr.mxu0 %v619
      %921 = vmatpush1.msra.mxu0 %v618
      %922 = vmatprep.subr.mxu0 %v621
      %923 = vmatpush1.msra.mxu0 %v620
      %924 = vmatprep.subr.mxu0 %v623
      %925 = vmatpush1.msra.mxu0 %v622
      %926 = vmatprep.subr.mxu0 %v625
      %927 = vmatpush1.msra.mxu0 %v624
      %928 = vmatprep.subr.mxu0 %v627
      %929 = vmatpush1.msra.mxu0 %v626
      %930 = vmatprep.subr.mxu0 %v629
      %931 = vmatpush1.msra.mxu0 %v628
      %932 = vmatprep.subr.mxu0 %v631
      %933 = vmatpush1.msra.mxu0 %v630
      %934 = vmatprep.subr.mxu0 %v633
      %935 = vmatpush1.msra.mxu0 %v632
      %936 = vmatprep.subr.mxu0 %v635
      %937 = vmatpush1.msra.mxu0 %v634
      %938 = vmatprep.subr.mxu0 %v637
      %939 = vmatpush1.msra.mxu0 %v636
      %940 = vmatprep.subr.mxu0 %v639
      %941 = vmatpush1.msra.mxu0 %v638
      %942 = vmatprep.subr.mxu0 %v641
      %943 = vmatpush1.msra.mxu0 %v640
      %944 = vmatprep.subr.mxu0 %v643
      %945 = vmatpush1.msra.mxu0 %v642
      %946 = vmatprep.subr.mxu0 %v645
      %947 = vmatpush1.msra.mxu0 %v644
      %948 = vmatprep.subr.mxu0 %v647
      %949 = vmatpush1.msra.mxu0 %v646
      %950 = vmatprep.subr.mxu0 %v649
      %951 = vmatpush1.msra.mxu0 %v648
      %952 = vmatprep.mubr.f32.mxu0 %v415
      %953 = vmatmul.mubr.f32.gmra.mrb[0].mxu0 %v414
      %v954 = vpop.f32.mrb[0].mxu0
      %v955 = vadd.f32 %v842, %v954
      %v956 = vpop.f32.mrb[0].mxu0
      %v957 = vadd.f32 %v844, %v956
      %958 = vmatprep.mubr.f32.mxu0 %v421
      %959 = vmatmul.mubr.f32.gmra.mrb[0].mxu0 %v420
      %v960 = vpop.f32.mrb[0].mxu0
      %v961 = vadd.f32 %v848, %v960
      %v962 = vpop.f32.mrb[0].mxu0
      %v963 = vadd.f32 %v850, %v962
      %964 = vmatprep.mubr.f32.mxu0 %v427
      %965 = vmatmul.mubr.f32.gmra.mrb[0].mxu0 %v426
      %v966 = vpop.f32.mrb[0].mxu0
      %v967 = vadd.f32 %v854, %v966
      %v968 = vpop.f32.mrb[0].mxu0
      %v969 = vadd.f32 %v856, %v968
      %970 = vmatprep.mubr.f32.mxu0 %v433
      %971 = vmatmul.mubr.f32.gmra.mrb[0].mxu0 %v432
      %v972 = vpop.f32.mrb[0].mxu0
      %v973 = vadd.f32 %v860, %v972
      %v974 = vpop.f32.mrb[0].mxu0
      %v975 = vadd.f32 %v862, %v974
      %976 = vmatprep.mubr.f32.mxu0 %v439
      %977 = vmatmul.mubr.f32.gmra.mrb[0].mxu0 %v438
      %v978 = vpop.f32.mrb[0].mxu0
      %v979 = vadd.f32 %v866, %v978
      %v980 = vpop.f32.mrb[0].mxu0
      %v981 = vadd.f32 %v868, %v980
      %982 = vmatprep.mubr.f32.mxu0 %v445
      %983 = vmatmul.mubr.f32.gmra.mrb[0].mxu0 %v444
      %v984 = vpop.f32.mrb[0].mxu0
      %v985 = vadd.f32 %v872, %v984
      %v986 = vpop.f32.mrb[0].mxu0
      %v987 = vadd.f32 %v874, %v986
      %988 = vmatprep.mubr.f32.mxu0 %v451
      %989 = vmatmul.mubr.f32.gmra.mrb[0].mxu0 %v450
      %v990 = vpop.f32.mrb[0].mxu0
      %v991 = vadd.f32 %v878, %v990
      %v992 = vpop.f32.mrb[0].mxu0
      %v993 = vadd.f32 %v880, %v992
      %994 = vmatprep.mubr.f32.mxu0 %v457
      %995 = vmatmul.mubr.f32.gmra.mrb[0].mxu0 %v456
      %v996 = vpop.f32.mrb[0].mxu0
      %v997 = vadd.f32 %v884, %v996
      %v998 = vpop.f32.mrb[0].mxu0
      %v999 = vadd.f32 %v886, %v998
      %1000 = vdwg.mxu0
      %v1001 = vld [vmem:[%s373] sm:$0xff]
      %v1002 = vld [vmem:[%s373 + $0x8] sm:$0xff]
      %v1003 = vld [vmem:[%s373 + $0x10] sm:$0xff]
      %v1004 = vld [vmem:[%s373 + $0x18] sm:$0xff]
      %v1005 = vld [vmem:[%s373 + $0x20] sm:$0xff]
      %v1006 = vld [vmem:[%s373 + $0x28] sm:$0xff]
      %v1007 = vld [vmem:[%s373 + $0x30] sm:$0xff]
      %v1008 = vld [vmem:[%s373 + $0x38] sm:$0xff]
      %1010 = vset.pattern.permute.xlu0 0
      %1011 = vperm.xlu0 %1010, %v1001
      %v1012 = vpop.permute.xlu0 %1011
      %1015 = vset.pattern.permute.xlu0 0
      %1016 = vperm.xlu0 %1015, %v1002
      %v1017 = vpop.permute.xlu0 %1016
      %1020 = vset.pattern.permute.xlu0 0
      %1021 = vperm.xlu0 %1020, %v1003
      %v1022 = vpop.permute.xlu0 %1021
      %1025 = vset.pattern.permute.xlu0 0
      %1026 = vperm.xlu0 %1025, %v1004
      %v1027 = vpop.permute.xlu0 %1026
      %1030 = vset.pattern.permute.xlu0 0
      %1031 = vperm.xlu0 %1030, %v1005
      %v1032 = vpop.permute.xlu0 %1031
      %1035 = vset.pattern.permute.xlu0 0
      %1036 = vperm.xlu0 %1035, %v1006
      %v1037 = vpop.permute.xlu0 %1036
      %1040 = vset.pattern.permute.xlu0 0
      %1041 = vperm.xlu0 %1040, %v1007
      %v1042 = vpop.permute.xlu0 %1041
      %1045 = vset.pattern.permute.xlu0 0
      %1046 = vperm.xlu0 %1045, %v1008
      %v1047 = vpop.permute.xlu0 %1046
      %v1049 = vadd.f32 %v955, %v1012
      %v1050 = vadd.f32 %v957, %v1012
      %v1051 = vadd.f32 %v961, %v1017
      %v1052 = vadd.f32 %v963, %v1017
      %v1053 = vadd.f32 %v967, %v1022
      %v1054 = vadd.f32 %v969, %v1022
      %v1055 = vadd.f32 %v973, %v1027
      %v1056 = vadd.f32 %v975, %v1027
      %v1057 = vadd.f32 %v979, %v1032
      %v1058 = vadd.f32 %v981, %v1032
      %v1059 = vadd.f32 %v985, %v1037
      %v1060 = vadd.f32 %v987, %v1037
      %v1061 = vadd.f32 %v991, %v1042
      %v1062 = vadd.f32 %v993, %v1042
      %v1063 = vadd.f32 %v997, %v1047
      %v1064 = vadd.f32 %v999, %v1047
      %v1065 = vxor.u32 %v1049, 2147483648
      %v1066 = vxor.u32 %v1050, 2147483648
      %v1067 = vxor.u32 %v1051, 2147483648
      %v1068 = vxor.u32 %v1052, 2147483648
      %v1069 = vxor.u32 %v1053, 2147483648
      %v1070 = vxor.u32 %v1054, 2147483648
      %v1071 = vxor.u32 %v1055, 2147483648
      %v1072 = vxor.u32 %v1056, 2147483648
      %v1073 = vxor.u32 %v1057, 2147483648
      %v1074 = vxor.u32 %v1058, 2147483648
      %v1075 = vxor.u32 %v1059, 2147483648
      %v1076 = vxor.u32 %v1060, 2147483648
      %v1077 = vxor.u32 %v1061, 2147483648
      %v1078 = vxor.u32 %v1062, 2147483648
      %v1079 = vxor.u32 %v1063, 2147483648
      %v1080 = vxor.u32 %v1064, 2147483648
      %v1081 = vmul.f32 %v1065, 1.442695
      %v1082 = vpow.pop %v1081
      %v1083 = vmul.f32 %v1066, 1.442695
      %v1084 = vpow.pop %v1083
      %v1085 = vmul.f32 %v1067, 1.442695
      %v1086 = vpow.pop %v1085
      %v1087 = vmul.f32 %v1068, 1.442695
      %v1088 = vpow.pop %v1087
      %v1089 = vmul.f32 %v1069, 1.442695
      %v1090 = vpow.pop %v1089
      %v1091 = vmul.f32 %v1070, 1.442695
      %v1092 = vpow.pop %v1091
      %v1093 = vmul.f32 %v1071, 1.442695
      %v1094 = vpow.pop %v1093
      %v1095 = vmul.f32 %v1072, 1.442695
      %v1096 = vpow.pop %v1095
      %v1097 = vmul.f32 %v1073, 1.442695
      %v1098 = vpow.pop %v1097
      %v1099 = vmul.f32 %v1074, 1.442695
      %v1100 = vpow.pop %v1099
      %v1101 = vmul.f32 %v1075, 1.442695
      %v1102 = vpow.pop %v1101
      %v1103 = vmul.f32 %v1076, 1.442695
      %v1104 = vpow.pop %v1103
      %v1105 = vmul.f32 %v1077, 1.442695
      %v1106 = vpow.pop %v1105
      %v1107 = vmul.f32 %v1078, 1.442695
      %v1108 = vpow.pop %v1107
      %v1109 = vmul.f32 %v1079, 1.442695
      %v1110 = vpow.pop %v1109
      %v1111 = vmul.f32 %v1080, 1.442695
      %v1112 = vpow.pop %v1111
      %v1113 = vadd.f32 %v1082, 1.0
      %v1114 = vadd.f32 %v1084, 1.0
      %v1115 = vadd.f32 %v1086, 1.0
      %v1116 = vadd.f32 %v1088, 1.0
      %v1117 = vadd.f32 %v1090, 1.0
      %v1118 = vadd.f32 %v1092, 1.0
      %v1119 = vadd.f32 %v1094, 1.0
      %v1120 = vadd.f32 %v1096, 1.0
      %v1121 = vadd.f32 %v1098, 1.0
      %v1122 = vadd.f32 %v1100, 1.0
      %v1123 = vadd.f32 %v1102, 1.0
      %v1124 = vadd.f32 %v1104, 1.0
      %v1125 = vadd.f32 %v1106, 1.0
      %v1126 = vadd.f32 %v1108, 1.0
      %v1127 = vadd.f32 %v1110, 1.0
      %v1128 = vadd.f32 %v1112, 1.0
      %v1129 = vrcp.pop %v1113
      %v1130 = vmul.f32 1.0, %v1129
      %v1131 = vrcp.pop %v1114
      %v1132 = vmul.f32 1.0, %v1131
      %v1133 = vrcp.pop %v1115
      %v1134 = vmul.f32 1.0, %v1133
      %v1135 = vrcp.pop %v1116
      %v1136 = vmul.f32 1.0, %v1135
      %v1137 = vrcp.pop %v1117
      %v1138 = vmul.f32 1.0, %v1137
      %v1139 = vrcp.pop %v1118
      %v1140 = vmul.f32 1.0, %v1139
      %v1141 = vrcp.pop %v1119
      %v1142 = vmul.f32 1.0, %v1141
      %v1143 = vrcp.pop %v1120
      %v1144 = vmul.f32 1.0, %v1143
      %v1145 = vrcp.pop %v1121
      %v1146 = vmul.f32 1.0, %v1145
      %v1147 = vrcp.pop %v1122
      %v1148 = vmul.f32 1.0, %v1147
      %v1149 = vrcp.pop %v1123
      %v1150 = vmul.f32 1.0, %v1149
      %v1151 = vrcp.pop %v1124
      %v1152 = vmul.f32 1.0, %v1151
      %v1153 = vrcp.pop %v1125
      %v1154 = vmul.f32 1.0, %v1153
      %v1155 = vrcp.pop %v1126
      %v1156 = vmul.f32 1.0, %v1155
      %v1157 = vrcp.pop %v1127
      %v1158 = vmul.f32 1.0, %v1157
      %v1159 = vrcp.pop %v1128
      %v1160 = vmul.f32 1.0, %v1159
      %1161 = vst [vmem:[%s407] sm:$0xff] %v1130
      %1162 = vst [vmem:[%s407 + $0x8] sm:$0xff] %v1132
      %1163 = vst [vmem:[%s407 + $0x10] sm:$0xff] %v1134
      %1164 = vst [vmem:[%s407 + $0x18] sm:$0xff] %v1136
      %1165 = vst [vmem:[%s407 + $0x20] sm:$0xff] %v1138
      %1166 = vst [vmem:[%s407 + $0x28] sm:$0xff] %v1140
      %1167 = vst [vmem:[%s407 + $0x30] sm:$0xff] %v1142
      %1168 = vst [vmem:[%s407 + $0x38] sm:$0xff] %v1144
      %1169 = vst [vmem:[%s407 + $0x40] sm:$0xff] %v1146
      %1170 = vst [vmem:[%s407 + $0x48] sm:$0xff] %v1148
      %1171 = vst [vmem:[%s407 + $0x50] sm:$0xff] %v1150
      %1172 = vst [vmem:[%s407 + $0x58] sm:$0xff] %v1152
      %1173 = vst [vmem:[%s407 + $0x60] sm:$0xff] %v1154
      %1174 = vst [vmem:[%s407 + $0x68] sm:$0xff] %v1156
      %1175 = vst [vmem:[%s407 + $0x70] sm:$0xff] %v1158
      %1176 = vst [vmem:[%s407 + $0x78] sm:$0xff] %v1160
      %s1177 = smul.u32 8, %s23
      %s1178 = smul.u32 2, %s24
      %p1179 = scmp.lt.s32.totalorder %s21, 1
      %s1180 = scalar_select %p1179, %s21, 1
      %p1181 = scmp.lt.s32.totalorder %s22, 3
      %s1182 = scalar_select %p1181, %s22, 3
      %p1183 = scmp.lt.s32.totalorder %s1177, 7
      %s1184 = scalar_select %p1183, %s1177, 7
      %p1185 = scmp.lt.s32.totalorder %s1178, 1
      %s1186 = scalar_select %p1185, %s1178, 1
      %s1187 = smul.addr %s1184, 2
      %s1188 = sadd.s32 %s1186, %s1187
      %s1189 = smul.addr %s1182, 16
      %s1190 = sadd.s32 %s1188, %s1189
      %s1191 = smul.addr %s1180, 64
      %s1192 = sadd.s32 %s1190, %s1191
      %s1193 = smul.addr %s1192, 8
      %s1194 = scalar_lea.vmem %s4, %s1193
      // Predicated region
      $region37: #{grid2d_forward_pallas.2} parent=35 // pred_check
        %p1195 = pneg %p181
      $region38: #{grid2d_forward_pallas.2} parent=35 // pred_check_branch
        %1197 = sbr.rel (%p1195) target = $region40
      $region39: #{grid2d_forward_pallas.2} parent=35 // pred_region
        %s1198 = smul.u32 8, %s23
        %s1199 = smul.u32 2, %s24
      $region40: #{grid2d_forward_pallas.2} parent=35 // pred_fallthru
        _
    $region36: #{grid2d_forward_pallas.2} parent=5 // pred_fallthru
      _
    %p1200 = scmp.le.s32.totalorder 2, %s10
    // Predicated region
    $region41: #{grid2d_forward_pallas.2} parent=5 // pred_check
      %p1201 = pneg %p1200
    $region42: #{grid2d_forward_pallas.2} parent=5 // pred_check_branch
      %1203 = sbr.rel (%p1201) target = $region44
    $region43: #{grid2d_forward_pallas.2} parent=5 // pred_region
      %s1204 = ssub.s32 %s10, 2
      // Predicated region
      $region45: #{grid2d_forward_pallas.2} parent=43 // pred_check
        %p1205 = pneg %p187
      $region46: #{grid2d_forward_pallas.2} parent=43 // pred_check_branch
        %1207 = sbr.rel (%p1205) target = $region48
      $region47: #{grid2d_forward_pallas.2} parent=43 // pred_region
        %s1208 = smul.u32 8, %s27
        %s1209 = smul.u32 2, %s28
        %p1210 = scmp.lt.s32.totalorder %s25, 1
        %s1211 = scalar_select %p1210, %s25, 1
        %p1212 = scmp.lt.s32.totalorder %s26, 3
        %s1213 = scalar_select %p1212, %s26, 3
        %p1214 = scmp.lt.s32.totalorder %s1208, 7
        %s1215 = scalar_select %p1214, %s1208, 7
        %p1216 = scmp.lt.s32.totalorder %s1209, 1
        %s1217 = scalar_select %p1216, %s1209, 1
        %s1218 = smul.addr %s1215, 2
        %s1219 = sadd.s32 %s1217, %s1218
        %s1220 = smul.addr %s1213, 16
        %s1221 = sadd.s32 %s1219, %s1220
        %s1222 = smul.addr %s1211, 64
        %s1223 = sadd.s32 %s1221, %s1222
        %s1224 = smul.addr %s1223, 8
        %s1225 = scalar_lea.vmem %s4, %s1224
      $region48: #{grid2d_forward_pallas.2} parent=43 // pred_fallthru
        _
    $region44: #{grid2d_forward_pallas.2} parent=5 // pred_fallthru
      _
  $region6: #{grid2d_forward_pallas.2} parent=0 // loop_footer
    %s14 = sadd.s32 1, %s10
  $region7: #{grid2d_forward_pallas.2} parent=0 // loop_footer_branch
    %9 = sbr.rel target = $region3
  $region8: #{grid2d_forward_pallas.2} parent=0 // loop_exit
    _

// kernel: grid2d_forward_pallas.3
$region0: #{grid2d_forward_pallas.3}
  #allocation0 [shape = 'u32[]', space=smem, size = 0x4, offset = 0x4, fixed_abs, tag = 'smem constant byte address 0x4 - core index']
  #allocation1 [shape = 'u32[144,128]{1,0:T(1,128)}', space=vmem, size = 0x12000, scoped, tag = 'internal scratch']
  #allocation2 [shape = 'f32[64,128]{1,0:T(8,128)}', space=vmem, size = 0x8000, scoped, tag = 'scratch operand']
  %s0 = inlined_call_operand.vmem [shape: bf16[2,64,1024], index: 0, kind: input, shape index: {}]
  %s1 = inlined_call_operand.vmem [shape: bf16[2,1024,128], index: 1, kind: input, shape index: {}]
  %s2 = inlined_call_operand.vmem [shape: f32[2,64,128], index: 2, kind: output, shape index: {}]
  %s3 = sld [smem:[#allocation0]]
  $region49: #{grid2d_forward_pallas.3} parent=0
    _
  %s5 = ssub.s32 1, %s3
  %s6 = scalar_select 0, %s5, %s3
  loop: start=0, step=1, limit=4
  $region2: #{grid2d_forward_pallas.3} parent=0 // loop_pre_header
    _
  $region3: #{grid2d_forward_pallas.3} parent=0 // loop_header
    %s8 = sphi 0, %s12
    %p9 = scmp.ge.s32.totalorder %s8, 4
    %s15 = sphi 0, %s34
    %s16 = sphi 0, %s30
    %s17 = sphi 0, %s26
    %s18 = sphi 0, %s15
    %s19 = sphi 0, %s16
    %s20 = sphi 0, %s17
    %s21 = sphi 0, %s18
    %s22 = sphi 0, %s19
    %s23 = sphi 0, %s20
    %s41 = sphi 0, %s43
    %s44 = sphi 0, %s41
    %s45 = sphi 0, %s44
    %s61 = sphi 0, %s45
    %s69 = sphi 0, %s71
    %s72 = sphi 0, %s69
    %s73 = sphi 0, %s72
    %s89 = sphi 0, %s73
    %s97 = sphi 0, %s99
    %s100 = sphi 0, %s97
    %s101 = sphi 0, %s100
    %s117 = sphi 0, %s101
  $region4: #{grid2d_forward_pallas.3} parent=0 // loop_header_branch
    %11 = sbr.rel (%p9) target = $region8
  $region5: #{grid2d_forward_pallas.3} parent=0 // loop_body
    %s13 = ssub.s32 %s8, 1
    %s14 = ssub.s32 %s8, 2
    %s24 = sadd.s32 1, %s17
    %p25 = scmp.ge.s32.totalorder %s24, 1
    %s26 = scalar_select %p25, 0, %s24
    %s27 = sadd.s32 1, %s16
    %s28 = scalar_select %p25, %s27, %s16
    %p29 = scmp.ge.s32.totalorder %s28, 1
    %s30 = scalar_select %p29, 0, %s28
    %s31 = sadd.s32 1, %s15
    %s32 = scalar_select %p29, %s31, %s15
    %p33 = scmp.ge.s32.totalorder %s32, 2
    %s34 = scalar_select %p33, 0, %s32
    %s35 = ssub.s32 %s15, %s34
    %s36 = ssub.s32 %s16, %s30
    %s37 = sor.u32 %s35, %s36
    %s38 = ssub.s32 %s17, %s26
    %s39 = sor.u32 %s37, %s38
    %p40 = scmp.eq.s32.totalorder %s39, 0
    %s42 = sadd.s32 %s41, 1
    %s43 = scalar_select %p40, %s41, %s42
    %p46 = pneg %p40
    %p47 = scmp.eq.s32.totalorder %s8, 1
    %p48 = por %p46, %p47
    %p49 = scmp.ne.s32.totalorder %s41, %s44
    %p50 = scmp.eq.s32.totalorder %s8, 0
    %p51 = por %p49, %p50
    %p52 = scmp.ne.s32.totalorder %s41, %s44
    %p53 = scmp.eq.s32.totalorder %s13, 1
    %p54 = por %p52, %p53
    %p55 = scmp.ne.s32.totalorder %s44, %s45
    %p56 = scmp.eq.s32.totalorder %s13, 0
    %p57 = por %p55, %p56
    %p58 = scmp.ne.s32.totalorder %s44, %s45
    %p59 = scmp.eq.s32.totalorder %s14, 1
    %p60 = por %p58, %p59
    %p62 = scmp.ne.s32.totalorder %s45, %s61
    %p63 = scmp.eq.s32.totalorder %s14, 0
    %p64 = por %p62, %p63
    %s65 = ssub.s32 %s15, %s34
    %s66 = ssub.s32 %s17, %s26
    %s67 = sor.u32 %s65, %s66
    %p68 = scmp.eq.s32.totalorder %s67, 0
    %s70 = sadd.s32 %s69, 1
    %s71 = scalar_select %p68, %s69, %s70
    %p74 = pneg %p68
    %p75 = scmp.eq.s32.totalorder %s8, 1
    %p76 = por %p74, %p75
    %p77 = scmp.ne.s32.totalorder %s69, %s72
    %p78 = scmp.eq.s32.totalorder %s8, 0
    %p79 = por %p77, %p78
    %p80 = scmp.ne.s32.totalorder %s69, %s72
    %p81 = scmp.eq.s32.totalorder %s13, 1
    %p82 = por %p80, %p81
    %p83 = scmp.ne.s32.totalorder %s72, %s73
    %p84 = scmp.eq.s32.totalorder %s13, 0
    %p85 = por %p83, %p84
    %p86 = scmp.ne.s32.totalorder %s72, %s73
    %p87 = scmp.eq.s32.totalorder %s14, 1
    %p88 = por %p86, %p87
    %p90 = scmp.ne.s32.totalorder %s73, %s89
    %p91 = scmp.eq.s32.totalorder %s14, 0
    %p92 = por %p90, %p91
    %s93 = ssub.s32 %s15, %s34
    %s94 = ssub.s32 %s16, %s30
    %s95 = sor.u32 %s93, %s94
    %p96 = scmp.eq.s32.totalorder %s95, 0
    %s98 = sadd.s32 %s97, 1
    %s99 = scalar_select %p96, %s97, %s98
    %p102 = pneg %p96
    %p103 = scmp.eq.s32.totalorder %s8, 1
    %p104 = por %p102, %p103
    %p105 = scmp.ne.s32.totalorder %s97, %s100
    %p106 = scmp.eq.s32.totalorder %s8, 0
    %p107 = por %p105, %p106
    %p108 = scmp.ne.s32.totalorder %s97, %s100
    %p109 = scmp.eq.s32.totalorder %s13, 1
    %p110 = por %p108, %p109
    %p111 = scmp.ne.s32.totalorder %s100, %s101
    %p112 = scmp.eq.s32.totalorder %s13, 0
    %p113 = por %p111, %p112
    %p114 = scmp.ne.s32.totalorder %s100, %s101
    %p115 = scmp.eq.s32.totalorder %s14, 1
    %p116 = por %p114, %p115
    %p118 = scmp.ne.s32.totalorder %s101, %s117
    %p119 = scmp.eq.s32.totalorder %s14, 0
    %p120 = por %p118, %p119
    %p121 = scmp.le.s32.totalorder 1, %s8
    %p122 = scmp.lt.s32.totalorder %s8, 3
    %p123 = pnand %p121, %p122
    %p124 = pneg %p123
    // Predicated region
    $region9: #{grid2d_forward_pallas.3} parent=5 // pred_check
      _
    $region10: #{grid2d_forward_pallas.3} parent=5 // pred_check_branch
      %126 = sbr.rel (%p123) target = $region12
    $region11: #{grid2d_forward_pallas.3} parent=5 // pred_region
      %s127 = ssub.s32 %s8, 1
    $region12: #{grid2d_forward_pallas.3} parent=5 // pred_fallthru
      _
    %p128 = scmp.lt.s32.totalorder %s8, 2
    // Predicated region
    $region13: #{grid2d_forward_pallas.3} parent=5 // pred_check
      %p129 = pneg %p128
    $region14: #{grid2d_forward_pallas.3} parent=5 // pred_check_branch
      %131 = sbr.rel (%p129) target = $region16
    $region15: #{grid2d_forward_pallas.3} parent=5 // pred_region
      // Predicated region
      $region17: #{grid2d_forward_pallas.3} parent=15 // pred_check
        %p132 = pneg %p51
      $region18: #{grid2d_forward_pallas.3} parent=15 // pred_check_branch
        %134 = sbr.rel (%p132) target = $region20
      $region19: #{grid2d_forward_pallas.3} parent=15 // pred_region
        %s135 = smul.u32 8, %s16
        %s136 = smul.u32 8, %s17
        %p137 = scmp.lt.s32.totalorder %s15, 1
        %s138 = scalar_select %p137, %s15, 1
        %p139 = scmp.lt.s32.totalorder %s135, 7
        %s140 = scalar_select %p139, %s135, 7
        %p141 = scmp.lt.s32.totalorder %s136, 7
        %s142 = scalar_select %p141, %s136, 7
        %s143 = smul.addr %s140, 8
        %s144 = sadd.s32 %s142, %s143
        %s145 = smul.addr %s138, 64
        %s146 = sadd.s32 %s144, %s145
        %s147 = smul.addr %s146, 4
        %s148 = scalar_lea.vmem %s0, %s147
        %s149 = smul.u32 8, %s16
        %s150 = smul.u32 8, %s17
      $region20: #{grid2d_forward_pallas.3} parent=15 // pred_fallthru
        _
      // Predicated region
      $region21: #{grid2d_forward_pallas.3} parent=15 // pred_check
        %p151 = pneg %p79
      $region22: #{grid2d_forward_pallas.3} parent=15 // pred_check_branch
        %153 = sbr.rel (%p151) target = $region24
      $region23: #{grid2d_forward_pallas.3} parent=15 // pred_region
        %s154 = smul.u32 128, %s17
        %p155 = scmp.lt.s32.totalorder %s15, 1
        %s156 = scalar_select %p155, %s15, 1
        %p157 = scmp.lt.s32.totalorder %s154, 127
        %s158 = scalar_select %p157, %s154, 127
        %s159 = smul.addr %s156, 128
        %s160 = sadd.s32 %s158, %s159
        %s161 = smul.addr %s160, 4
        %s162 = scalar_lea.vmem %s1, %s161
        %s163 = smul.u32 128, %s17
      $region24: #{grid2d_forward_pallas.3} parent=15 // pred_fallthru
        _
    $region16: #{grid2d_forward_pallas.3} parent=5 // pred_fallthru
      _
    %p164 = scmp.le.s32.totalorder 1, %s8
    %p165 = scmp.lt.s32.totalorder %s8, 3
    %p166 = pnand %p164, %p165
    %p167 = pneg %p166
    // Predicated region
    $region25: #{grid2d_forward_pallas.3} parent=5 // pred_check
      _
    $region26: #{grid2d_forward_pallas.3} parent=5 // pred_check_branch
      %169 = sbr.rel (%p166) target = $region28
    $region27: #{grid2d_forward_pallas.3} parent=5 // pred_region
      %s170 = ssub.s32 %s8, 1
      %s171 = smul.u32 8, %s19
      %s172 = smul.u32 8, %s20
      %p173 = scmp.lt.s32.totalorder %s18, 1
      %s174 = scalar_select %p173, %s18, 1
      %p175 = scmp.lt.s32.totalorder %s171, 7
      %s176 = scalar_select %p175, %s171, 7
      %p177 = scmp.lt.s32.totalorder %s172, 7
      %s178 = scalar_select %p177, %s172, 7
      %s179 = smul.addr %s176, 8
      %s180 = sadd.s32 %s178, %s179
      %s181 = smul.addr %s174, 64
      %s182 = sadd.s32 %s180, %s181
      %s183 = smul.addr %s182, 4
      %s184 = scalar_lea.vmem %s0, %s183
      %p185 = pneg %p57
      %p186 = pneg %p54
      %s187 = smul.u32 128, %s20
      %p188 = scmp.lt.s32.totalorder %s18, 1
      %s189 = scalar_select %p188, %s18, 1
      %p190 = scmp.lt.s32.totalorder %s187, 127
      %s191 = scalar_select %p190, %s187, 127
      %s192 = smul.addr %s189, 128
      %s193 = sadd.s32 %s191, %s192
      %s194 = smul.addr %s193, 4
      %s195 = scalar_lea.vmem %s1, %s194
      %p196 = pneg %p85
      %p197 = pneg %p82
      %p198 = pneg %p113
      %p199 = pneg %p110
      %s200 = smul.u32 8, %s19
      %p201 = scmp.lt.s32.totalorder %s18, 1
      %s202 = scalar_select %p201, %s18, 1
      %p203 = scmp.lt.s32.totalorder %s200, 7
      %s204 = scalar_select %p203, %s200, 7
      %s205 = smul.addr %s202, 8
      %s206 = sadd.s32 %s204, %s205
      %s207 = smul.addr %s206, 8
      %s208 = scalar_lea.vmem %s2, %s207
      %s209 = smul.u32 8, %s19
      %s210 = smul.u32 8, %s20
      %p211 = scmp.lt.s32.totalorder %s18, 1
      %s212 = scalar_select %p211, %s18, 1
      %p213 = scmp.lt.s32.totalorder %s209, 7
      %s214 = scalar_select %p213, %s209, 7
      %p215 = scmp.lt.s32.totalorder %s210, 7
      %s216 = scalar_select %p215, %s210, 7
      %s217 = smul.addr %s214, 8
      %s218 = sadd.s32 %s216, %s217
      %s219 = smul.addr %s212, 64
      %s220 = sadd.s32 %s218, %s219
      %s221 = smul.addr %s220, 4
      %s222 = scalar_lea.vmem %s0, %s221
      %s223 = smul.u32 8, %s19
      %s224 = smul.u32 8, %s20
      %s225 = smul.u32 128, %s20
      %p226 = scmp.lt.s32.totalorder %s18, 1
      %s227 = scalar_select %p226, %s18, 1
      %p228 = scmp.lt.s32.totalorder %s225, 127
      %s229 = scalar_select %p228, %s225, 127
      %s230 = smul.addr %s227, 128
      %s231 = sadd.s32 %s229, %s230
      %s232 = smul.addr %s231, 4
      %s233 = scalar_lea.vmem %s1, %s232
      %s234 = smul.u32 128, %s20
      %s235 = smul.u32 8, %s19
      %p236 = scmp.lt.s32.totalorder %s18, 1
      %s237 = scalar_select %p236, %s18, 1
      %p238 = scmp.lt.s32.totalorder %s235, 7
      %s239 = scalar_select %p238, %s235, 7
      %s240 = smul.addr %s237, 8
      %s241 = sadd.s32 %s239, %s240
      %s242 = smul.addr %s241, 8
      %s243 = scalar_lea.vmem %s2, %s242
      %s244 = smul.u32 8, %s19
      %p246 = scmp.eq.s32.totalorder %s20, 0
      // Predicated region
      $region29: #{grid2d_forward_pallas.3} parent=27 // pred_check
        %p247 = pneg %p246
      $region30: #{grid2d_forward_pallas.3} parent=27 // pred_check_branch
        %249 = sbr.rel (%p247) target = $region32
      $region31: #{grid2d_forward_pallas.3} parent=27 // pred_region
        %250 = vst [vmem:[#allocation2] sm:$0xff] 0.0
        %251 = vst [vmem:[#allocation2 + $0x8] sm:$0xff] 0.0
        %252 = vst [vmem:[#allocation2 + $0x10] sm:$0xff] 0.0
        %253 = vst [vmem:[#allocation2 + $0x18] sm:$0xff] 0.0
        %254 = vst [vmem:[#allocation2 + $0x20] sm:$0xff] 0.0
        %255 = vst [vmem:[#allocation2 + $0x28] sm:$0xff] 0.0
        %256 = vst [vmem:[#allocation2 + $0x30] sm:$0xff] 0.0
        %257 = vst [vmem:[#allocation2 + $0x38] sm:$0xff] 0.0
      $region32: #{grid2d_forward_pallas.3} parent=27 // pred_fallthru
        _
      %v258 = vld [vmem:[#allocation2] sm:$0xff]
      %v259 = vld [vmem:[#allocation2 + $0x8] sm:$0xff]
      %v260 = vld [vmem:[#allocation2 + $0x10] sm:$0xff]
      %v261 = vld [vmem:[#allocation2 + $0x18] sm:$0xff]
      %v262 = vld [vmem:[#allocation2 + $0x20] sm:$0xff]
      %v263 = vld [vmem:[#allocation2 + $0x28] sm:$0xff]
      %v264 = vld [vmem:[#allocation2 + $0x30] sm:$0xff]
      %v265 = vld [vmem:[#allocation2 + $0x38] sm:$0xff]
      %v266 = vld [vmem:[%s222] sm:$0xff]
      %v267 = vld [vmem:[%s222 + $0x8] sm:$0xff]
      %v268 = vld [vmem:[%s222 + $0x10] sm:$0xff]
      %v269 = vld [vmem:[%s222 + $0x18] sm:$0xff]
      %v270 = vld [vmem:[%s222 + $0x20] sm:$0xff]
      %v271 = vld [vmem:[%s222 + $0x28] sm:$0xff]
      %v272 = vld [vmem:[%s222 + $0x30] sm:$0xff]
      %v273 = vld [vmem:[%s222 + $0x38] sm:$0xff]
      %v274 = vld [vmem:[%s222 + $0x40] sm:$0xff]
      %v275 = vld [vmem:[%s222 + $0x48] sm:$0xff]
      %v276 = vld [vmem:[%s222 + $0x50] sm:$0xff]
      %v277 = vld [vmem:[%s222 + $0x58] sm:$0xff]
      %v278 = vld [vmem:[%s222 + $0x60] sm:$0xff]
      %v279 = vld [vmem:[%s222 + $0x68] sm:$0xff]
      %v280 = vld [vmem:[%s222 + $0x70] sm:$0xff]
      %v281 = vld [vmem:[%s222 + $0x78] sm:$0xff]
      %v282 = vld [vmem:[%s222 + $0x80] sm:$0xff]
      %v283 = vld [vmem:[%s222 + $0x88] sm:$0xff]
      %v284 = vld [vmem:[%s222 + $0x90] sm:$0xff]
      %v285 = vld [vmem:[%s222 + $0x98] sm:$0xff]
      %v286 = vld [vmem:[%s222 + $0xa0] sm:$0xff]
      %v287 = vld [vmem:[%s222 + $0xa8] sm:$0xff]
      %v288 = vld [vmem:[%s222 + $0xb0] sm:$0xff]
      %v289 = vld [vmem:[%s222 + $0xb8] sm:$0xff]
      %v290 = vld [vmem:[%s222 + $0xc0] sm:$0xff]
      %v291 = vld [vmem:[%s222 + $0xc8] sm:$0xff]
      %v292 = vld [vmem:[%s222 + $0xd0] sm:$0xff]
      %v293 = vld [vmem:[%s222 + $0xd8] sm:$0xff]
      %v294 = vld [vmem:[%s222 + $0xe0] sm:$0xff]
      %v295 = vld [vmem:[%s222 + $0xe8] sm:$0xff]
      %v296 = vld [vmem:[%s222 + $0xf0] sm:$0xff]
      %v297 = vld [vmem:[%s222 + $0xf8] sm:$0xff]
      %v298 = vld [vmem:[%s233] sm:$0xf]
      %v299 = vld [vmem:[%s233 + $0x4] sm:$0xf]
      %v300 = vld [vmem:[%s233 + $0x8] sm:$0xf]
      %v301 = vld [vmem:[%s233 + $0xc] sm:$0xf]
      %v302 = vld [vmem:[%s233 + $0x10] sm:$0xf]
      %v303 = vld [vmem:[%s233 + $0x14] sm:$0xf]
      %v304 = vld [vmem:[%s233 + $0x18] sm:$0xf]
      %v305 = vld [vmem:[%s233 + $0x1c] sm:$0xf]
      %v306 = vld [vmem:[%s233 + $0x20] sm:$0xf]
      %v307 = vld [vmem:[%s233 + $0x24] sm:$0xf]
      %v308 = vld [vmem:[%s233 + $0x28] sm:$0xf]
      %v309 = vld [vmem:[%s233 + $0x2c] sm:$0xf]
      %v310 = vld [vmem:[%s233 + $0x30] sm:$0xf]
      %v311 = vld [vmem:[%s233 + $0x34] sm:$0xf]
      %v312 = vld [vmem:[%s233 + $0x38] sm:$0xf]
      %v313 = vld [vmem:[%s233 + $0x3c] sm:$0xf]
      %v314 = vld [vmem:[%s233 + $0x40] sm:$0xf]
      %v315 = vld [vmem:[%s233 + $0x44] sm:$0xf]
      %v316 = vld [vmem:[%s233 + $0x48] sm:$0xf]
      %v317 = vld [vmem:[%s233 + $0x4c] sm:$0xf]
      %v318 = vld [vmem:[%s233 + $0x50] sm:$0xf]
      %v319 = vld [vmem:[%s233 + $0x54] sm:$0xf]
      %v320 = vld [vmem:[%s233 + $0x58] sm:$0xf]
      %v321 = vld [vmem:[%s233 + $0x5c] sm:$0xf]
      %v322 = vld [vmem:[%s233 + $0x60] sm:$0xf]
      %v323 = vld [vmem:[%s233 + $0x64] sm:$0xf]
      %v324 = vld [vmem:[%s233 + $0x68] sm:$0xf]
      %v325 = vld [vmem:[%s233 + $0x6c] sm:$0xf]
      %v326 = vld [vmem:[%s233 + $0x70] sm:$0xf]
      %v327 = vld [vmem:[%s233 + $0x74] sm:$0xf]
      %v328 = vld [vmem:[%s233 + $0x78] sm:$0xf]
      %v329 = vld [vmem:[%s233 + $0x7c] sm:$0xf]
      %v330 = vld [vmem:[%s233 + $0x80] sm:$0xf]
      %v331 = vld [vmem:[%s233 + $0x84] sm:$0xf]
      %v332 = vld [vmem:[%s233 + $0x88] sm:$0xf]
      %v333 = vld [vmem:[%s233 + $0x8c] sm:$0xf]
      %v334 = vld [vmem:[%s233 + $0x90] sm:$0xf]
      %v335 = vld [vmem:[%s233 + $0x94] sm:$0xf]
      %v336 = vld [vmem:[%s233 + $0x98] sm:$0xf]
      %v337 = vld [vmem:[%s233 + $0x9c] sm:$0xf]
      %v338 = vld [vmem:[%s233 + $0xa0] sm:$0xf]
      %v339 = vld [vmem:[%s233 + $0xa4] sm:$0xf]
      %v340 = vld [vmem:[%s233 + $0xa8] sm:$0xf]
      %v341 = vld [vmem:[%s233 + $0xac] sm:$0xf]
      %v342 = vld [vmem:[%s233 + $0xb0] sm:$0xf]
      %v343 = vld [vmem:[%s233 + $0xb4] sm:$0xf]
      %v344 = vld [vmem:[%s233 + $0xb8] sm:$0xf]
      %v345 = vld [vmem:[%s233 + $0xbc] sm:$0xf]
      %v346 = vld [vmem:[%s233 + $0xc0] sm:$0xf]
      %v347 = vld [vmem:[%s233 + $0xc4] sm:$0xf]
      %v348 = vld [vmem:[%s233 + $0xc8] sm:$0xf]
      %v349 = vld [vmem:[%s233 + $0xcc] sm:$0xf]
      %v350 = vld [vmem:[%s233 + $0xd0] sm:$0xf]
      %v351 = vld [vmem:[%s233 + $0xd4] sm:$0xf]
      %v352 = vld [vmem:[%s233 + $0xd8] sm:$0xf]
      %v353 = vld [vmem:[%s233 + $0xdc] sm:$0xf]
      %v354 = vld [vmem:[%s233 + $0xe0] sm:$0xf]
      %v355 = vld [vmem:[%s233 + $0xe4] sm:$0xf]
      %v356 = vld [vmem:[%s233 + $0xe8] sm:$0xf]
      %v357 = vld [vmem:[%s233 + $0xec] sm:$0xf]
      %v358 = vld [vmem:[%s233 + $0xf0] sm:$0xf]
      %v359 = vld [vmem:[%s233 + $0xf4] sm:$0xf]
      %v360 = vld [vmem:[%s233 + $0xf8] sm:$0xf]
      %v361 = vld [vmem:[%s233 + $0xfc] sm:$0xf]
      %v362 = vld [vmem:[%s233 + $0x100] sm:$0xf]
      %v363 = vld [vmem:[%s233 + $0x104] sm:$0xf]
      %v364 = vld [vmem:[%s233 + $0x108] sm:$0xf]
      %v365 = vld [vmem:[%s233 + $0x10c] sm:$0xf]
      %v366 = vld [vmem:[%s233 + $0x110] sm:$0xf]
      %v367 = vld [vmem:[%s233 + $0x114] sm:$0xf]
      %v368 = vld [vmem:[%s233 + $0x118] sm:$0xf]
      %v369 = vld [vmem:[%s233 + $0x11c] sm:$0xf]
      %v370 = vld [vmem:[%s233 + $0x120] sm:$0xf]
      %v371 = vld [vmem:[%s233 + $0x124] sm:$0xf]
      %v372 = vld [vmem:[%s233 + $0x128] sm:$0xf]
      %v373 = vld [vmem:[%s233 + $0x12c] sm:$0xf]
      %v374 = vld [vmem:[%s233 + $0x130] sm:$0xf]
      %v375 = vld [vmem:[%s233 + $0x134] sm:$0xf]
      %v376 = vld [vmem:[%s233 + $0x138] sm:$0xf]
      %v377 = vld [vmem:[%s233 + $0x13c] sm:$0xf]
      %v378 = vld [vmem:[%s233 + $0x140] sm:$0xf]
      %v379 = vld [vmem:[%s233 + $0x144] sm:$0xf]
      %v380 = vld [vmem:[%s233 + $0x148] sm:$0xf]
      %v381 = vld [vmem:[%s233 + $0x14c] sm:$0xf]
      %v382 = vld [vmem:[%s233 + $0x150] sm:$0xf]
      %v383 = vld [vmem:[%s233 + $0x154] sm:$0xf]
      %v384 = vld [vmem:[%s233 + $0x158] sm:$0xf]
      %v385 = vld [vmem:[%s233 + $0x15c] sm:$0xf]
      %v386 = vld [vmem:[%s233 + $0x160] sm:$0xf]
      %v387 = vld [vmem:[%s233 + $0x164] sm:$0xf]
      %v388 = vld [vmem:[%s233 + $0x168] sm:$0xf]
      %v389 = vld [vmem:[%s233 + $0x16c] sm:$0xf]
      %v390 = vld [vmem:[%s233 + $0x170] sm:$0xf]
      %v391 = vld [vmem:[%s233 + $0x174] sm:$0xf]
      %v392 = vld [vmem:[%s233 + $0x178] sm:$0xf]
      %v393 = vld [vmem:[%s233 + $0x17c] sm:$0xf]
      %v394 = vld [vmem:[%s233 + $0x180] sm:$0xf]
      %v395 = vld [vmem:[%s233 + $0x184] sm:$0xf]
      %v396 = vld [vmem:[%s233 + $0x188] sm:$0xf]
      %v397 = vld [vmem:[%s233 + $0x18c] sm:$0xf]
      %v398 = vld [vmem:[%s233 + $0x190] sm:$0xf]
      %v399 = vld [vmem:[%s233 + $0x194] sm:$0xf]
      %v400 = vld [vmem:[%s233 + $0x198] sm:$0xf]
      %v401 = vld [vmem:[%s233 + $0x19c] sm:$0xf]
      %v402 = vld [vmem:[%s233 + $0x1a0] sm:$0xf]
      %v403 = vld [vmem:[%s233 + $0x1a4] sm:$0xf]
      %v404 = vld [vmem:[%s233 + $0x1a8] sm:$0xf]
      %v405 = vld [vmem:[%s233 + $0x1ac] sm:$0xf]
      %v406 = vld [vmem:[%s233 + $0x1b0] sm:$0xf]
      %v407 = vld [vmem:[%s233 + $0x1b4] sm:$0xf]
      %v408 = vld [vmem:[%s233 + $0x1b8] sm:$0xf]
      %v409 = vld [vmem:[%s233 + $0x1bc] sm:$0xf]
      %v410 = vld [vmem:[%s233 + $0x1c0] sm:$0xf]
      %v411 = vld [vmem:[%s233 + $0x1c4] sm:$0xf]
      %v412 = vld [vmem:[%s233 + $0x1c8] sm:$0xf]
      %v413 = vld [vmem:[%s233 + $0x1cc] sm:$0xf]
      %v414 = vld [vmem:[%s233 + $0x1d0] sm:$0xf]
      %v415 = vld [vmem:[%s233 + $0x1d4] sm:$0xf]
      %v416 = vld [vmem:[%s233 + $0x1d8] sm:$0xf]
      %v417 = vld [vmem:[%s233 + $0x1dc] sm:$0xf]
      %v418 = vld [vmem:[%s233 + $0x1e0] sm:$0xf]
      %v419 = vld [vmem:[%s233 + $0x1e4] sm:$0xf]
      %v420 = vld [vmem:[%s233 + $0x1e8] sm:$0xf]
      %v421 = vld [vmem:[%s233 + $0x1ec] sm:$0xf]
      %v422 = vld [vmem:[%s233 + $0x1f0] sm:$0xf]
      %v423 = vld [vmem:[%s233 + $0x1f4] sm:$0xf]
      %v424 = vld [vmem:[%s233 + $0x1f8] sm:$0xf]
      %v425 = vld [vmem:[%s233 + $0x1fc] sm:$0xf]
      %v458 = vunpack.c.l.b16 %v266
      %v459 = vunpack.c.h.b16 %v266
      %v460 = vunpack.c.l.b16 %v267
      %v461 = vunpack.c.h.b16 %v267
      %v462 = vunpack.c.l.b16 %v268
      %v463 = vunpack.c.h.b16 %v268
      %v464 = vunpack.c.l.b16 %v269
      %v465 = vunpack.c.h.b16 %v269
      %v466 = vunpack.c.l.b16 %v270
      %v467 = vunpack.c.h.b16 %v270
      %v468 = vunpack.c.l.b16 %v271
      %v469 = vunpack.c.h.b16 %v271
      %v470 = vunpack.c.l.b16 %v272
      %v471 = vunpack.c.h.b16 %v272
      %v472 = vunpack.c.l.b16 %v273
      %v473 = vunpack.c.h.b16 %v273
      %v474 = vunpack.c.l.b16 %v274
      %v475 = vunpack.c.h.b16 %v274
      %v476 = vunpack.c.l.b16 %v275
      %v477 = vunpack.c.h.b16 %v275
      %v478 = vunpack.c.l.b16 %v276
      %v479 = vunpack.c.h.b16 %v276
      %v480 = vunpack.c.l.b16 %v277
      %v481 = vunpack.c.h.b16 %v277
      %v482 = vunpack.c.l.b16 %v278
      %v483 = vunpack.c.h.b16 %v278
      %v484 = vunpack.c.l.b16 %v279
      %v485 = vunpack.c.h.b16 %v279
      %v486 = vunpack.c.l.b16 %v280
      %v487 = vunpack.c.h.b16 %v280
      %v488 = vunpack.c.l.b16 %v281
      %v489 = vunpack.c.h.b16 %v281
      %v490 = vunpack.c.l.b16 %v282
      %v491 = vunpack.c.h.b16 %v282
      %v492 = vunpack.c.l.b16 %v283
      %v493 = vunpack.c.h.b16 %v283
      %v494 = vunpack.c.l.b16 %v284
      %v495 = vunpack.c.h.b16 %v284
      %v496 = vunpack.c.l.b16 %v285
      %v497 = vunpack.c.h.b16 %v285
      %v498 = vunpack.c.l.b16 %v286
      %v499 = vunpack.c.h.b16 %v286
      %v500 = vunpack.c.l.b16 %v287
      %v501 = vunpack.c.h.b16 %v287
      %v502 = vunpack.c.l.b16 %v288
      %v503 = vunpack.c.h.b16 %v288
      %v504 = vunpack.c.l.b16 %v289
      %v505 = vunpack.c.h.b16 %v289
      %v506 = vunpack.c.l.b16 %v290
      %v507 = vunpack.c.h.b16 %v290
      %v508 = vunpack.c.l.b16 %v291
      %v509 = vunpack.c.h.b16 %v291
      %v510 = vunpack.c.l.b16 %v292
      %v511 = vunpack.c.h.b16 %v292
      %v512 = vunpack.c.l.b16 %v293
      %v513 = vunpack.c.h.b16 %v293
      %v514 = vunpack.c.l.b16 %v294
      %v515 = vunpack.c.h.b16 %v294
      %v516 = vunpack.c.l.b16 %v295
      %v517 = vunpack.c.h.b16 %v295
      %v518 = vunpack.c.l.b16 %v296
      %v519 = vunpack.c.h.b16 %v296
      %v520 = vunpack.c.l.b16 %v297
      %v521 = vunpack.c.h.b16 %v297
      %v522 = vpack.c.b16 %v466, %v458
      %v523 = vpack.c.b16 %v467, %v459
      %v524 = vpack.c.b16 %v468, %v460
      %v525 = vpack.c.b16 %v469, %v461
      %v526 = vpack.c.b16 %v470, %v462
      %v527 = vpack.c.b16 %v471, %v463
      %v528 = vpack.c.b16 %v472, %v464
      %v529 = vpack.c.b16 %v473, %v465
      %v530 = vpack.c.b16 %v482, %v474
      %v531 = vpack.c.b16 %v483, %v475
      %v532 = vpack.c.b16 %v484, %v476
      %v533 = vpack.c.b16 %v485, %v477
      %v534 = vpack.c.b16 %v486, %v478
      %v535 = vpack.c.b16 %v487, %v479
      %v536 = vpack.c.b16 %v488, %v480
      %v537 = vpack.c.b16 %v489, %v481
      %v538 = vpack.c.b16 %v498, %v490
      %v539 = vpack.c.b16 %v499, %v491
      %v540 = vpack.c.b16 %v500, %v492
      %v541 = vpack.c.b16 %v501, %v493
      %v542 = vpack.c.b16 %v502, %v494
      %v543 = vpack.c.b16 %v503, %v495
      %v544 = vpack.c.b16 %v504, %v496
      %v545 = vpack.c.b16 %v505, %v497
      %v546 = vpack.c.b16 %v514, %v506
      %v547 = vpack.c.b16 %v515, %v507
      %v548 = vpack.c.b16 %v516, %v508
      %v549 = vpack.c.b16 %v517, %v509
      %v550 = vpack.c.b16 %v518, %v510
      %v551 = vpack.c.b16 %v519, %v511
      %v552 = vpack.c.b16 %v520, %v512
      %v553 = vpack.c.b16 %v521, %v513
      %v714 = vunpack.c.l.b16 %v298
      %v715 = vunpack.c.l.b16 %v299
      %v716 = vunpack.c.l.b16 %v300
      %v717 = vunpack.c.l.b16 %v301
      %v718 = vunpack.c.l.b16 %v302
      %v719 = vunpack.c.l.b16 %v303
      %v720 = vunpack.c.l.b16 %v304
      %v721 = vunpack.c.l.b16 %v305
      %v722 = vunpack.c.l.b16 %v306
      %v723 = vunpack.c.l.b16 %v307
      %v724 = vunpack.c.l.b16 %v308
      %v725 = vunpack.c.l.b16 %v309
      %v726 = vunpack.c.l.b16 %v310
      %v727 = vunpack.c.l.b16 %v311
      %v728 = vunpack.c.l.b16 %v312
      %v729 = vunpack.c.l.b16 %v313
      %v730 = vunpack.c.l.b16 %v314
      %v731 = vunpack.c.l.b16 %v315
      %v732 = vunpack.c.l.b16 %v316
      %v733 = vunpack.c.l.b16 %v317
      %v734 = vunpack.c.l.b16 %v318
      %v735 = vunpack.c.l.b16 %v319
      %v736 = vunpack.c.l.b16 %v320
      %v737 = vunpack.c.l.b16 %v321
      %v738 = vunpack.c.l.b16 %v322
      %v739 = vunpack.c.l.b16 %v323
      %v740 = vunpack.c.l.b16 %v324
      %v741 = vunpack.c.l.b16 %v325
      %v742 = vunpack.c.l.b16 %v326
      %v743 = vunpack.c.l.b16 %v327
      %v744 = vunpack.c.l.b16 %v328
      %v745 = vunpack.c.l.b16 %v329
      %v746 = vunpack.c.l.b16 %v330
      %v747 = vunpack.c.l.b16 %v331
      %v748 = vunpack.c.l.b16 %v332
      %v749 = vunpack.c.l.b16 %v333
      %v750 = vunpack.c.l.b16 %v334
      %v751 = vunpack.c.l.b16 %v335
      %v752 = vunpack.c.l.b16 %v336
      %v753 = vunpack.c.l.b16 %v337
      %v754 = vunpack.c.l.b16 %v338
      %v755 = vunpack.c.l.b16 %v339
      %v756 = vunpack.c.l.b16 %v340
      %v757 = vunpack.c.l.b16 %v341
      %v758 = vunpack.c.l.b16 %v342
      %v759 = vunpack.c.l.b16 %v343
      %v760 = vunpack.c.l.b16 %v344
      %v761 = vunpack.c.l.b16 %v345
      %v762 = vunpack.c.l.b16 %v346
      %v763 = vunpack.c.l.b16 %v347
      %v764 = vunpack.c.l.b16 %v348
      %v765 = vunpack.c.l.b16 %v349
      %v766 = vunpack.c.l.b16 %v350
      %v767 = vunpack.c.l.b16 %v351
      %v768 = vunpack.c.l.b16 %v352
      %v769 = vunpack.c.l.b16 %v353
      %v770 = vunpack.c.l.b16 %v354
      %v771 = vunpack.c.l.b16 %v355
      %v772 = vunpack.c.l.b16 %v356
      %v773 = vunpack.c.l.b16 %v357
      %v774 = vunpack.c.l.b16 %v358
      %v775 = vunpack.c.l.b16 %v359
      %v776 = vunpack.c.l.b16 %v360
      %v777 = vunpack.c.l.b16 %v361
      %v778 = vunpack.c.l.b16 %v362
      %v779 = vunpack.c.l.b16 %v363
      %v780 = vunpack.c.l.b16 %v364
      %v781 = vunpack.c.l.b16 %v365
      %v782 = vunpack.c.l.b16 %v366
      %v783 = vunpack.c.l.b16 %v367
      %v784 = vunpack.c.l.b16 %v368
      %v785 = vunpack.c.l.b16 %v369
      %v786 = vunpack.c.l.b16 %v370
      %v787 = vunpack.c.l.b16 %v371
      %v788 = vunpack.c.l.b16 %v372
      %v789 = vunpack.c.l.b16 %v373
      %v790 = vunpack.c.l.b16 %v374
      %v791 = vunpack.c.l.b16 %v375
      %v792 = vunpack.c.l.b16 %v376
      %v793 = vunpack.c.l.b16 %v377
      %v794 = vunpack.c.l.b16 %v378
      %v795 = vunpack.c.l.b16 %v379
      %v796 = vunpack.c.l.b16 %v380
      %v797 = vunpack.c.l.b16 %v381
      %v798 = vunpack.c.l.b16 %v382
      %v799 = vunpack.c.l.b16 %v383
      %v800 = vunpack.c.l.b16 %v384
      %v801 = vunpack.c.l.b16 %v385
      %v802 = vunpack.c.l.b16 %v386
      %v803 = vunpack.c.l.b16 %v387
      %v804 = vunpack.c.l.b16 %v388
      %v805 = vunpack.c.l.b16 %v389
      %v806 = vunpack.c.l.b16 %v390
      %v807 = vunpack.c.l.b16 %v391
      %v808 = vunpack.c.l.b16 %v392
      %v809 = vunpack.c.l.b16 %v393
      %v810 = vunpack.c.l.b16 %v394
      %v811 = vunpack.c.l.b16 %v395
      %v812 = vunpack.c.l.b16 %v396
      %v813 = vunpack.c.l.b16 %v397
      %v814 = vunpack.c.l.b16 %v398
      %v815 = vunpack.c.l.b16 %v399
      %v816 = vunpack.c.l.b16 %v400
      %v817 = vunpack.c.l.b16 %v401
      %v818 = vunpack.c.l.b16 %v402
      %v819 = vunpack.c.l.b16 %v403
      %v820 = vunpack.c.l.b16 %v404
      %v821 = vunpack.c.l.b16 %v405
      %v822 = vunpack.c.l.b16 %v406
      %v823 = vunpack.c.l.b16 %v407
      %v824 = vunpack.c.l.b16 %v408
      %v825 = vunpack.c.l.b16 %v409
      %v826 = vunpack.c.l.b16 %v410
      %v827 = vunpack.c.l.b16 %v411
      %v828 = vunpack.c.l.b16 %v412
      %v829 = vunpack.c.l.b16 %v413
      %v830 = vunpack.c.l.b16 %v414
      %v831 = vunpack.c.l.b16 %v415
      %v832 = vunpack.c.l.b16 %v416
      %v833 = vunpack.c.l.b16 %v417
      %v834 = vunpack.c.l.b16 %v418
      %v835 = vunpack.c.l.b16 %v419
      %v836 = vunpack.c.l.b16 %v420
      %v837 = vunpack.c.l.b16 %v421
      %v838 = vunpack.c.l.b16 %v422
      %v839 = vunpack.c.l.b16 %v423
      %v840 = vunpack.c.l.b16 %v424
      %v841 = vunpack.c.l.b16 %v425
      %v842 = vpack.c.b16 %v715, %v714
      %v843 = vpack.c.b16 %v717, %v716
      %v844 = vpack.c.b16 %v719, %v718
      %v845 = vpack.c.b16 %v721, %v720
      %v846 = vpack.c.b16 %v723, %v722
      %v847 = vpack.c.b16 %v725, %v724
      %v848 = vpack.c.b16 %v727, %v726
      %v849 = vpack.c.b16 %v729, %v728
      %v850 = vpack.c.b16 %v731, %v730
      %v851 = vpack.c.b16 %v733, %v732
      %v852 = vpack.c.b16 %v735, %v734
      %v853 = vpack.c.b16 %v737, %v736
      %v854 = vpack.c.b16 %v739, %v738
      %v855 = vpack.c.b16 %v741, %v740
      %v856 = vpack.c.b16 %v743, %v742
      %v857 = vpack.c.b16 %v745, %v744
      %v858 = vpack.c.b16 %v747, %v746
      %v859 = vpack.c.b16 %v749, %v748
      %v860 = vpack.c.b16 %v751, %v750
      %v861 = vpack.c.b16 %v753, %v752
      %v862 = vpack.c.b16 %v755, %v754
      %v863 = vpack.c.b16 %v757, %v756
      %v864 = vpack.c.b16 %v759, %v758
      %v865 = vpack.c.b16 %v761, %v760
      %v866 = vpack.c.b16 %v763, %v762
      %v867 = vpack.c.b16 %v765, %v764
      %v868 = vpack.c.b16 %v767, %v766
      %v869 = vpack.c.b16 %v769, %v768
      %v870 = vpack.c.b16 %v771, %v770
      %v871 = vpack.c.b16 %v773, %v772
      %v872 = vpack.c.b16 %v775, %v774
      %v873 = vpack.c.b16 %v777, %v776
      %v874 = vpack.c.b16 %v779, %v778
      %v875 = vpack.c.b16 %v781, %v780
      %v876 = vpack.c.b16 %v783, %v782
      %v877 = vpack.c.b16 %v785, %v784
      %v878 = vpack.c.b16 %v787, %v786
      %v879 = vpack.c.b16 %v789, %v788
      %v880 = vpack.c.b16 %v791, %v790
      %v881 = vpack.c.b16 %v793, %v792
      %v882 = vpack.c.b16 %v795, %v794
      %v883 = vpack.c.b16 %v797, %v796
      %v884 = vpack.c.b16 %v799, %v798
      %v885 = vpack.c.b16 %v801, %v800
      %v886 = vpack.c.b16 %v803, %v802
      %v887 = vpack.c.b16 %v805, %v804
      %v888 = vpack.c.b16 %v807, %v806
      %v889 = vpack.c.b16 %v809, %v808
      %v890 = vpack.c.b16 %v811, %v810
      %v891 = vpack.c.b16 %v813, %v812
      %v892 = vpack.c.b16 %v815, %v814
      %v893 = vpack.c.b16 %v817, %v816
      %v894 = vpack.c.b16 %v819, %v818
      %v895 = vpack.c.b16 %v821, %v820
      %v896 = vpack.c.b16 %v823, %v822
      %v897 = vpack.c.b16 %v825, %v824
      %v898 = vpack.c.b16 %v827, %v826
      %v899 = vpack.c.b16 %v829, %v828
      %v900 = vpack.c.b16 %v831, %v830
      %v901 = vpack.c.b16 %v833, %v832
      %v902 = vpack.c.b16 %v835, %v834
      %v903 = vpack.c.b16 %v837, %v836
      %v904 = vpack.c.b16 %v839, %v838
      %v905 = vpack.c.b16 %v841, %v840
      %970 = vmatprep.subr.bf16.mxu0 0
      %971 = vmatpush1.bf16.msra.mxu0 %v842
      %972 = vmatprep.subr.bf16.mxu0 0
      %973 = vmatpush1.bf16.msra.mxu0 %v843
      %974 = vmatprep.subr.bf16.mxu0 0
      %975 = vmatpush1.bf16.msra.mxu0 %v844
      %976 = vmatprep.subr.bf16.mxu0 0
      %977 = vmatpush1.bf16.msra.mxu0 %v845
      %978 = vmatprep.subr.bf16.mxu0 0
      %979 = vmatpush1.bf16.msra.mxu0 %v846
      %980 = vmatprep.subr.bf16.mxu0 0
      %981 = vmatpush1.bf16.msra.mxu0 %v847
      %982 = vmatprep.subr.bf16.mxu0 0
      %983 = vmatpush1.bf16.msra.mxu0 %v848
      %984 = vmatprep.subr.bf16.mxu0 0
      %985 = vmatpush1.bf16.msra.mxu0 %v849
      %986 = vmatprep.subr.bf16.mxu0 0
      %987 = vmatpush1.bf16.msra.mxu0 %v850
      %988 = vmatprep.subr.bf16.mxu0 0
      %989 = vmatpush1.bf16.msra.mxu0 %v851
      %990 = vmatprep.subr.bf16.mxu0 0
      %991 = vmatpush1.bf16.msra.mxu0 %v852
      %992 = vmatprep.subr.bf16.mxu0 0
      %993 = vmatpush1.bf16.msra.mxu0 %v853
      %994 = vmatprep.subr.bf16.mxu0 0
      %995 = vmatpush1.bf16.msra.mxu0 %v854
      %996 = vmatprep.subr.bf16.mxu0 0
      %997 = vmatpush1.bf16.msra.mxu0 %v855
      %998 = vmatprep.subr.bf16.mxu0 0
      %999 = vmatpush1.bf16.msra.mxu0 %v856
      %1000 = vmatprep.subr.bf16.mxu0 0
      %1001 = vmatpush1.bf16.msra.mxu0 %v857
      %1002 = vmatprep.mubr.bf16.mxu0 %v523
      %1003 = vmatmul.mubr.bf16.gmra.mrb[0].mxu0 %v522
      %v1004 = vpop.f32.mrb[0].mxu0
      %v1005 = vadd.f32 0.0, %v1004
      %v1006 = vpop.f32.mrb[0].mxu0
      %v1007 = vpop.f32.mrb[0].mxu0
      %v1008 = vadd.f32 0.0, %v1007
      %v1009 = vpop.f32.mrb[0].mxu0
      %1010 = vmatprep.mubr.bf16.mxu0 %v531
      %1011 = vmatmul.mubr.bf16.gmra.mrb[0].mxu0 %v530
      %v1012 = vpop.f32.mrb[0].mxu0
      %v1013 = vadd.f32 0.0, %v1012
      %v1014 = vpop.f32.mrb[0].mxu0
      %v1015 = vpop.f32.mrb[0].mxu0
      %v1016 = vadd.f32 0.0, %v1015
      %v1017 = vpop.f32.mrb[0].mxu0
      %1018 = vmatprep.mubr.bf16.mxu0 %v539
      %1019 = vmatmul.mubr.bf16.gmra.mrb[0].mxu0 %v538
      %v1020 = vpop.f32.mrb[0].mxu0
      %v1021 = vadd.f32 0.0, %v1020
      %v1022 = vpop.f32.mrb[0].mxu0
      %v1023 = vpop.f32.mrb[0].mxu0
      %v1024 = vadd.f32 0.0, %v1023
      %v1025 = vpop.f32.mrb[0].mxu0
      %1026 = vmatprep.mubr.bf16.mxu0 %v547
      %1027 = vmatmul.mubr.bf16.gmra.mrb[0].mxu0 %v546
      %v1028 = vpop.f32.mrb[0].mxu0
      %v1029 = vadd.f32 0.0, %v1028
      %v1030 = vpop.f32.mrb[0].mxu0
      %v1031 = vpop.f32.mrb[0].mxu0
      %v1032 = vadd.f32 0.0, %v1031
      %v1033 = vpop.f32.mrb[0].mxu0
      %1034 = vdwg.mxu0
      %1035 = vmatprep.subr.bf16.mxu0 0
      %1036 = vmatpush1.bf16.msra.mxu0 %v858
      %1037 = vmatprep.subr.bf16.mxu0 0
      %1038 = vmatpush1.bf16.msra.mxu0 %v859
      %1039 = vmatprep.subr.bf16.mxu0 0
      %1040 = vmatpush1.bf16.msra.mxu0 %v860
      %1041 = vmatprep.subr.bf16.mxu0 0
      %1042 = vmatpush1.bf16.msra.mxu0 %v861
      %1043 = vmatprep.subr.bf16.mxu0 0
      %1044 = vmatpush1.bf16.msra.mxu0 %v862
      %1045 = vmatprep.subr.bf16.mxu0 0
      %1046 = vmatpush1.bf16.msra.mxu0 %v863
      %1047 = vmatprep.subr.bf16.mxu0 0
      %1048 = vmatpush1.bf16.msra.mxu0 %v864
      %1049 = vmatprep.subr.bf16.mxu0 0
      %1050 = vmatpush1.bf16.msra.mxu0 %v865
      %1051 = vmatprep.subr.bf16.mxu0 0
      %1052 = vmatpush1.bf16.msra.mxu0 %v866
      %1053 = vmatprep.subr.bf16.mxu0 0
      %1054 = vmatpush1.bf16.msra.mxu0 %v867
      %1055 = vmatprep.subr.bf16.mxu0 0
      %1056 = vmatpush1.bf16.msra.mxu0 %v868
      %1057 = vmatprep.subr.bf16.mxu0 0
      %1058 = vmatpush1.bf16.msra.mxu0 %v869
      %1059 = vmatprep.subr.bf16.mxu0 0
      %1060 = vmatpush1.bf16.msra.mxu0 %v870
      %1061 = vmatprep.subr.bf16.mxu0 0
      %1062 = vmatpush1.bf16.msra.mxu0 %v871
      %1063 = vmatprep.subr.bf16.mxu0 0
      %1064 = vmatpush1.bf16.msra.mxu0 %v872
      %1065 = vmatprep.subr.bf16.mxu0 0
      %1066 = vmatpush1.bf16.msra.mxu0 %v873
      %1067 = vmatprep.mubr.bf16.mxu0 %v525
      %1068 = vmatmul.mubr.bf16.gmra.mrb[0].mxu0 %v524
      %v1069 = vpop.f32.mrb[0].mxu0
      %v1070 = vadd.f32 %v1005, %v1069
      %v1071 = vpop.f32.mrb[0].mxu0
      %v1072 = vpop.f32.mrb[0].mxu0
      %v1073 = vadd.f32 %v1008, %v1072
      %v1074 = vpop.f32.mrb[0].mxu0
      %1075 = vmatprep.mubr.bf16.mxu0 %v533
      %1076 = vmatmul.mubr.bf16.gmra.mrb[0].mxu0 %v532
      %v1077 = vpop.f32.mrb[0].mxu0
      %v1078 = vadd.f32 %v1013, %v1077
      %v1079 = vpop.f32.mrb[0].mxu0
      %v1080 = vpop.f32.mrb[0].mxu0
      %v1081 = vadd.f32 %v1016, %v1080
      %v1082 = vpop.f32.mrb[0].mxu0
      %1083 = vmatprep.mubr.bf16.mxu0 %v541
      %1084 = vmatmul.mubr.bf16.gmra.mrb[0].mxu0 %v540
      %v1085 = vpop.f32.mrb[0].mxu0
      %v1086 = vadd.f32 %v1021, %v1085
      %v1087 = vpop.f32.mrb[0].mxu0
      %v1088 = vpop.f32.mrb[0].mxu0
      %v1089 = vadd.f32 %v1024, %v1088
      %v1090 = vpop.f32.mrb[0].mxu0
      %1091 = vmatprep.mubr.bf16.mxu0 %v549
      %1092 = vmatmul.mubr.bf16.gmra.mrb[0].mxu0 %v548
      %v1093 = vpop.f32.mrb[0].mxu0
      %v1094 = vadd.f32 %v1029, %v1093
      %v1095 = vpop.f32.mrb[0].mxu0
      %v1096 = vpop.f32.mrb[0].mxu0
      %v1097 = vadd.f32 %v1032, %v1096
      %v1098 = vpop.f32.mrb[0].mxu0
      %1099 = vdwg.mxu0
      %1100 = vmatprep.subr.bf16.mxu0 0
      %1101 = vmatpush1.bf16.msra.mxu0 %v874
      %1102 = vmatprep.subr.bf16.mxu0 0
      %1103 = vmatpush1.bf16.msra.mxu0 %v875
      %1104 = vmatprep.subr.bf16.mxu0 0
      %1105 = vmatpush1.bf16.msra.mxu0 %v876
      %1106 = vmatprep.subr.bf16.mxu0 0
      %1107 = vmatpush1.bf16.msra.mxu0 %v877
      %1108 = vmatprep.subr.bf16.mxu0 0
      %1109 = vmatpush1.bf16.msra.mxu0 %v878
      %1110 = vmatprep.subr.bf16.mxu0 0
      %1111 = vmatpush1.bf16.msra.mxu0 %v879
      %1112 = vmatprep.subr.bf16.mxu0 0
      %1113 = vmatpush1.bf16.msra.mxu0 %v880
      %1114 = vmatprep.subr.bf16.mxu0 0
      %1115 = vmatpush1.bf16.msra.mxu0 %v881
      %1116 = vmatprep.subr.bf16.mxu0 0
      %1117 = vmatpush1.bf16.msra.mxu0 %v882
      %1118 = vmatprep.subr.bf16.mxu0 0
      %1119 = vmatpush1.bf16.msra.mxu0 %v883
      %1120 = vmatprep.subr.bf16.mxu0 0
      %1121 = vmatpush1.bf16.msra.mxu0 %v884
      %1122 = vmatprep.subr.bf16.mxu0 0
      %1123 = vmatpush1.bf16.msra.mxu0 %v885
      %1124 = vmatprep.subr.bf16.mxu0 0
      %1125 = vmatpush1.bf16.msra.mxu0 %v886
      %1126 = vmatprep.subr.bf16.mxu0 0
      %1127 = vmatpush1.bf16.msra.mxu0 %v887
      %1128 = vmatprep.subr.bf16.mxu0 0
      %1129 = vmatpush1.bf16.msra.mxu0 %v888
      %1130 = vmatprep.subr.bf16.mxu0 0
      %1131 = vmatpush1.bf16.msra.mxu0 %v889
      %1132 = vmatprep.mubr.bf16.mxu0 %v527
      %1133 = vmatmul.mubr.bf16.gmra.mrb[0].mxu0 %v526
      %v1134 = vpop.f32.mrb[0].mxu0
      %v1135 = vadd.f32 %v1070, %v1134
      %v1136 = vpop.f32.mrb[0].mxu0
      %v1137 = vpop.f32.mrb[0].mxu0
      %v1138 = vadd.f32 %v1073, %v1137
      %v1139 = vpop.f32.mrb[0].mxu0
      %1140 = vmatprep.mubr.bf16.mxu0 %v535
      %1141 = vmatmul.mubr.bf16.gmra.mrb[0].mxu0 %v534
      %v1142 = vpop.f32.mrb[0].mxu0
      %v1143 = vadd.f32 %v1078, %v1142
      %v1144 = vpop.f32.mrb[0].mxu0
      %v1145 = vpop.f32.mrb[0].mxu0
      %v1146 = vadd.f32 %v1081, %v1145
      %v1147 = vpop.f32.mrb[0].mxu0
      %1148 = vmatprep.mubr.bf16.mxu0 %v543
      %1149 = vmatmul.mubr.bf16.gmra.mrb[0].mxu0 %v542
      %v1150 = vpop.f32.mrb[0].mxu0
      %v1151 = vadd.f32 %v1086, %v1150
      %v1152 = vpop.f32.mrb[0].mxu0
      %v1153 = vpop.f32.mrb[0].mxu0
      %v1154 = vadd.f32 %v1089, %v1153
      %v1155 = vpop.f32.mrb[0].mxu0
      %1156 = vmatprep.mubr.bf16.mxu0 %v551
      %1157 = vmatmul.mubr.bf16.gmra.mrb[0].mxu0 %v550
      %v1158 = vpop.f32.mrb[0].mxu0
      %v1159 = vadd.f32 %v1094, %v1158
      %v1160 = vpop.f32.mrb[0].mxu0
      %v1161 = vpop.f32.mrb[0].mxu0
      %v1162 = vadd.f32 %v1097, %v1161
      %v1163 = vpop.f32.mrb[0].mxu0
      %1164 = vdwg.mxu0
      %1165 = vmatprep.subr.bf16.mxu0 0
      %1166 = vmatpush1.bf16.msra.mxu0 %v890
      %1167 = vmatprep.subr.bf16.mxu0 0
      %1168 = vmatpush1.bf16.msra.mxu0 %v891
      %1169 = vmatprep.subr.bf16.mxu0 0
      %1170 = vmatpush1.bf16.msra.mxu0 %v892
      %1171 = vmatprep.subr.bf16.mxu0 0
      %1172 = vmatpush1.bf16.msra.mxu0 %v893
      %1173 = vmatprep.subr.bf16.mxu0 0
      %1174 = vmatpush1.bf16.msra.mxu0 %v894
      %1175 = vmatprep.subr.bf16.mxu0 0
      %1176 = vmatpush1.bf16.msra.mxu0 %v895
      %1177 = vmatprep.subr.bf16.mxu0 0
      %1178 = vmatpush1.bf16.msra.mxu0 %v896
      %1179 = vmatprep.subr.bf16.mxu0 0
      %1180 = vmatpush1.bf16.msra.mxu0 %v897
      %1181 = vmatprep.subr.bf16.mxu0 0
      %1182 = vmatpush1.bf16.msra.mxu0 %v898
      %1183 = vmatprep.subr.bf16.mxu0 0
      %1184 = vmatpush1.bf16.msra.mxu0 %v899
      %1185 = vmatprep.subr.bf16.mxu0 0
      %1186 = vmatpush1.bf16.msra.mxu0 %v900
      %1187 = vmatprep.subr.bf16.mxu0 0
      %1188 = vmatpush1.bf16.msra.mxu0 %v901
      %1189 = vmatprep.subr.bf16.mxu0 0
      %1190 = vmatpush1.bf16.msra.mxu0 %v902
      %1191 = vmatprep.subr.bf16.mxu0 0
      %1192 = vmatpush1.bf16.msra.mxu0 %v903
      %1193 = vmatprep.subr.bf16.mxu0 0
      %1194 = vmatpush1.bf16.msra.mxu0 %v904
      %1195 = vmatprep.subr.bf16.mxu0 0
      %1196 = vmatpush1.bf16.msra.mxu0 %v905
      %1197 = vmatprep.mubr.bf16.mxu0 %v529
      %1198 = vmatmul.mubr.bf16.gmra.mrb[0].mxu0 %v528
      %v1199 = vpop.f32.mrb[0].mxu0
      %v1200 = vadd.f32 %v1135, %v1199
      %v1201 = vpop.f32.mrb[0].mxu0
      %v1202 = vpop.f32.mrb[0].mxu0
      %v1203 = vadd.f32 %v1138, %v1202
      %v1204 = vpop.f32.mrb[0].mxu0
      %1205 = vmatprep.mubr.bf16.mxu0 %v537
      %1206 = vmatmul.mubr.bf16.gmra.mrb[0].mxu0 %v536
      %v1207 = vpop.f32.mrb[0].mxu0
      %v1208 = vadd.f32 %v1143, %v1207
      %v1209 = vpop.f32.mrb[0].mxu0
      %v1210 = vpop.f32.mrb[0].mxu0
      %v1211 = vadd.f32 %v1146, %v1210
      %v1212 = vpop.f32.mrb[0].mxu0
      %1213 = vmatprep.mubr.bf16.mxu0 %v545
      %1214 = vmatmul.mubr.bf16.gmra.mrb[0].mxu0 %v544
      %v1215 = vpop.f32.mrb[0].mxu0
      %v1216 = vadd.f32 %v1151, %v1215
      %v1217 = vpop.f32.mrb[0].mxu0
      %v1218 = vpop.f32.mrb[0].mxu0
      %v1219 = vadd.f32 %v1154, %v1218
      %v1220 = vpop.f32.mrb[0].mxu0
      %1221 = vmatprep.mubr.bf16.mxu0 %v553
      %1222 = vmatmul.mubr.bf16.gmra.mrb[0].mxu0 %v552
      %v1223 = vpop.f32.mrb[0].mxu0
      %v1224 = vadd.f32 %v1159, %v1223
      %v1225 = vpop.f32.mrb[0].mxu0
      %v1226 = vpop.f32.mrb[0].mxu0
      %v1227 = vadd.f32 %v1162, %v1226
      %v1228 = vpop.f32.mrb[0].mxu0
      %1229 = vdwg.mxu0
      %v1230 = vadd.f32 %v258, %v1200
      %v1231 = vadd.f32 %v259, %v1203
      %v1232 = vadd.f32 %v260, %v1208
      %v1233 = vadd.f32 %v261, %v1211
      %v1234 = vadd.f32 %v262, %v1216
      %v1235 = vadd.f32 %v263, %v1219
      %v1236 = vadd.f32 %v264, %v1224
      %v1237 = vadd.f32 %v265, %v1227
      %1238 = vst [vmem:[#allocation2] sm:$0xff] %v1230
      %1239 = vst [vmem:[#allocation2 + $0x8] sm:$0xff] %v1231
      %1240 = vst [vmem:[#allocation2 + $0x10] sm:$0xff] %v1232
      %1241 = vst [vmem:[#allocation2 + $0x18] sm:$0xff] %v1233
      %1242 = vst [vmem:[#allocation2 + $0x20] sm:$0xff] %v1234
      %1243 = vst [vmem:[#allocation2 + $0x28] sm:$0xff] %v1235
      %1244 = vst [vmem:[#allocation2 + $0x30] sm:$0xff] %v1236
      %1245 = vst [vmem:[#allocation2 + $0x38] sm:$0xff] %v1237
      // Predicated region
      $region33: #{grid2d_forward_pallas.3} parent=27 // pred_check
        %p1246 = pneg %p246
      $region34: #{grid2d_forward_pallas.3} parent=27 // pred_check_branch
        %1248 = sbr.rel (%p1246) target = $region36
      $region35: #{grid2d_forward_pallas.3} parent=27 // pred_region
        %v1249 = vld [vmem:[#allocation2] sm:$0xff]
        %v1250 = vld [vmem:[#allocation2 + $0x8] sm:$0xff]
        %v1251 = vld [vmem:[#allocation2 + $0x10] sm:$0xff]
        %v1252 = vld [vmem:[#allocation2 + $0x18] sm:$0xff]
        %v1253 = vld [vmem:[#allocation2 + $0x20] sm:$0xff]
        %v1254 = vld [vmem:[#allocation2 + $0x28] sm:$0xff]
        %v1255 = vld [vmem:[#allocation2 + $0x30] sm:$0xff]
        %v1256 = vld [vmem:[#allocation2 + $0x38] sm:$0xff]
        %1257 = vst [vmem:[%s243] sm:$0xff] %v1249
        %1258 = vst [vmem:[%s243 + $0x8] sm:$0xff] %v1250
        %1259 = vst [vmem:[%s243 + $0x10] sm:$0xff] %v1251
        %1260 = vst [vmem:[%s243 + $0x18] sm:$0xff] %v1252
        %1261 = vst [vmem:[%s243 + $0x20] sm:$0xff] %v1253
        %1262 = vst [vmem:[%s243 + $0x28] sm:$0xff] %v1254
        %1263 = vst [vmem:[%s243 + $0x30] sm:$0xff] %v1255
        %1264 = vst [vmem:[%s243 + $0x38] sm:$0xff] %v1256
      $region36: #{grid2d_forward_pallas.3} parent=27 // pred_fallthru
        _
      %s1265 = smul.u32 8, %s19
      %p1266 = scmp.lt.s32.totalorder %s18, 1
      %s1267 = scalar_select %p1266, %s18, 1
      %p1268 = scmp.lt.s32.totalorder %s1265, 7
      %s1269 = scalar_select %p1268, %s1265, 7
      %s1270 = smul.addr %s1267, 8
      %s1271 = sadd.s32 %s1269, %s1270
      %s1272 = smul.addr %s1271, 8
      %s1273 = scalar_lea.vmem %s2, %s1272
      // Predicated region
      $region37: #{grid2d_forward_pallas.3} parent=27 // pred_check
        %p1274 = pneg %p110
      $region38: #{grid2d_forward_pallas.3} parent=27 // pred_check_branch
        %1276 = sbr.rel (%p1274) target = $region40
      $region39: #{grid2d_forward_pallas.3} parent=27 // pred_region
        %s1277 = smul.u32 8, %s19
      $region40: #{grid2d_forward_pallas.3} parent=27 // pred_fallthru
        _
    $region28: #{grid2d_forward_pallas.3} parent=5 // pred_fallthru
      _
    %p1278 = scmp.le.s32.totalorder 2, %s8
    // Predicated region
    $region41: #{grid2d_forward_pallas.3} parent=5 // pred_check
      %p1279 = pneg %p1278
    $region42: #{grid2d_forward_pallas.3} parent=5 // pred_check_branch
      %1281 = sbr.rel (%p1279) target = $region44
    $region43: #{grid2d_forward_pallas.3} parent=5 // pred_region
      %s1282 = ssub.s32 %s8, 2
      // Predicated region
      $region45: #{grid2d_forward_pallas.3} parent=43 // pred_check
        %p1283 = pneg %p116
      $region46: #{grid2d_forward_pallas.3} parent=43 // pred_check_branch
        %1285 = sbr.rel (%p1283) target = $region48
      $region47: #{grid2d_forward_pallas.3} parent=43 // pred_region
        %s1286 = smul.u32 8, %s22
        %p1287 = scmp.lt.s32.totalorder %s21, 1
        %s1288 = scalar_select %p1287, %s21, 1
        %p1289 = scmp.lt.s32.totalorder %s1286, 7
        %s1290 = scalar_select %p1289, %s1286, 7
        %s1291 = smul.addr %s1288, 8
        %s1292 = sadd.s32 %s1290, %s1291
        %s1293 = smul.addr %s1292, 8
        %s1294 = scalar_lea.vmem %s2, %s1293
      $region48: #{grid2d_forward_pallas.3} parent=43 // pred_fallthru
        _
    $region44: #{grid2d_forward_pallas.3} parent=5 // pred_fallthru
      _
  $region6: #{grid2d_forward_pallas.3} parent=0 // loop_footer
    %s12 = sadd.s32 1, %s8
  $region7: #{grid2d_forward_pallas.3} parent=0 // loop_footer_branch
    %7 = sbr.rel target = $region3
  $region8: #{grid2d_forward_pallas.3} parent=0 // loop_exit
    _

</llo_original>
